<compile_context>
chip_gen: v7x
topology: tpu7x:2x2x1
jax: 0.10.0
libtpu: 0.0.40
codegen_flags: <defaults>
</compile_context>

<pallas_src>
import functools
import numpy as np
import jax
import jax.numpy as jnp
from jax import lax
from jax.experimental import pallas as pl
from jax.experimental.pallas import tpu as pltpu


def _round_up(x, m):
    return ((x + m - 1) // m) * m


# ----------------------------- Pallas kernel ---------------------------------

def _decoder_lstm_kernel(x_ref, w_ih_ref, w_hh_ref, b_ref, w_out_ref, b_out_ref,
                         out_ref, gx_ref, hs_ref, *, t1, n_pad, hidden):
    """Full decoder forward in one invocation.

    x_ref    : (T1*Np, E)   time-major inputs, row = t*Np + n
    w_ih_ref : (E, 4H)      input->gates weights, gate order [i, f, o, g]
    w_hh_ref : (H, 4H)      hidden->gates weights, gate order [i, f, o, g]
    b_ref    : (1, 4H)      b_ih + b_hh, gate order [i, f, o, g]
    w_out_ref: (H, Vp)      Linear weight, vocab padded to a 128-lane multiple
    b_out_ref: (1, Vp)      Linear bias (padded)
    out_ref  : (T1*Np, Vp)  per-timestep logits
    gx_ref   : (T1*Np, 4H)  scratch: precomputed input projections
    hs_ref   : (T1*Np, H)   scratch: hidden-state history
    """
    H = hidden
    Np = n_pad

    # (1) Input projection for all timesteps at once (independent of h).
    gx_ref[...] = (jnp.dot(x_ref[...], w_ih_ref[...],
                           preferred_element_type=jnp.float32) + b_ref[...])

    # (2) Serial recurrence: a single (Np, H) @ (H, 4H) matmul per step.
    w_hh = w_hh_ref[...]

    def step(t, carry):
        h, c = carry
        row = pl.multiple_of(t * Np, Np)
        gates = gx_ref[pl.ds(row, Np), :] + jnp.dot(
            h, w_hh, preferred_element_type=jnp.float32)        # (Np, 4H)
        sig = jax.nn.sigmoid(gates[:, :3 * H])                   # [i | f | o] contiguous
        g_g = jnp.tanh(gates[:, 3 * H:])                         # [g]
        i_g = sig[:, :H]
        f_g = sig[:, H:2 * H]
        o_g = sig[:, 2 * H:3 * H]
        c_new = f_g * c + i_g * g_g
        h_new = o_g * jnp.tanh(c_new)
        hs_ref[pl.ds(row, Np), :] = h_new
        return h_new, c_new

    h0 = jnp.zeros((Np, H), jnp.float32)
    c0 = jnp.zeros((Np, H), jnp.float32)
    lax.fori_loop(0, t1, step, (h0, c0), unroll=True)

    # (3) Output projection hoisted out of the recurrence: one batched matmul.
    out_ref[...] = (jnp.dot(hs_ref[...], w_out_ref[...],
                            preferred_element_type=jnp.float32) + b_out_ref[...])


def lstm_decoder_pallas(x_tm, w_ih, w_hh, b, w_out, b_out):
    """x_tm: (T1, N, E) time-major f32. Returns (T1, N, V) f32 logits."""
    T1, N, E = x_tm.shape
    H = w_hh.shape[0]
    V = w_out.shape[1]

    Np = _round_up(max(N, 8), 8)        # f32 sublane count
    Vp = _round_up(max(V, 128), 128)    # lane-dense output width

    # Pad batch rows (sliced back off below) and flatten to 2-D, row = t*Np + n.
    x_pad = jnp.zeros((T1, Np, E), jnp.float32).at[:, :N, :].set(x_tm)
    x2d = x_pad.reshape(T1 * Np, E)

    # Re-order gate columns [i, f, g, o] (PyTorch) -> [i, f, o, g] so the kernel's
    # nonlinearities act on two contiguous lane regions.
    perm = np.concatenate([np.arange(0, H), np.arange(H, 2 * H),
                           np.arange(3 * H, 4 * H), np.arange(2 * H, 3 * H)])
    w_ih_k = w_ih[:, perm]
    w_hh_k = w_hh[:, perm]
    b_k = b[:, perm]

    # Pad the output projection to a full 128-lane width (unmasked stores).
    w_out_p = jnp.zeros((H, Vp), jnp.float32).at[:, :V].set(w_out)
    b_out_p = jnp.zeros((1, Vp), jnp.float32).at[:, :V].set(b_out)

    kernel = functools.partial(_decoder_lstm_kernel, t1=T1, n_pad=Np, hidden=H)
    vmem_spec = pl.BlockSpec(memory_space=pltpu.MemorySpace.VMEM)

    out2d = pl.pallas_call(
        kernel,
        out_shape=jax.ShapeDtypeStruct((T1 * Np, Vp), jnp.float32),
        in_specs=[vmem_spec] * 6,
        out_specs=vmem_spec,
        scratch_shapes=[
            pltpu.VMEM((T1 * Np, 4 * H), jnp.float32),   # gx: input projections
            pltpu.VMEM((T1 * Np, H), jnp.float32),        # hs: hidden history
        ],
    )(x2d, w_ih_k, w_hh_k, b_k, w_out_p, b_out_p)

    return out2d.reshape(T1, Np, Vp)[:, :N, :V]


# ---------------------------- forward (glue + kernel) -------------------------

def decoder_rnn_forward(params, formula, lengths):
    """formula: (N, T) int32, lengths: python list sorted descending (<= T+1)."""
    emb = params["embed"][formula]                                  # (N, T, E) gather (glue)
    # torch.cat((formula.unsqueeze(1), embeddings), 1) -> requires T == E
    seq = jnp.concatenate(
        [formula[:, None, :].astype(emb.dtype), emb], axis=1)       # (N, T+1, E)
    x_tm = jnp.transpose(seq, (1, 0, 2)).astype(jnp.float32)        # (T+1, N, E) time-major

    logits_full = lstm_decoder_pallas(
        x_tm, params["w_ih"], params["w_hh"], params["b"],
        params["w_out"], params["b_out"])                           # (T+1, N, V)

    # pack_padded_sequence(batch_first=True) ordering: time-major, at each t keep
    # batch rows with lengths[b] > t (lengths sorted descending / enforce_sorted).
    T1 = x_tm.shape[0]
    idx_t, idx_b = [], []
    for t in range(T1):
        for b_i in range(len(lengths)):
            if lengths[b_i] > t:
                idx_t.append(t)
                idx_b.append(b_i)
    idx_t = jnp.asarray(idx_t, jnp.int32)
    idx_b = jnp.asarray(idx_b, jnp.int32)
    return logits_full[idx_t, idx_b]                                # (sum(lengths), V)


# ------------------------------- reference -----------------------------------

def decoder_rnn_ref(params, formula, lengths):
    emb = params["embed"][formula]
    seq = jnp.concatenate([formula[:, None, :].astype(emb.dtype), emb], axis=1)
    x_tm = jnp.transpose(seq, (1, 0, 2)).astype(jnp.float32)
    T1, N, _ = x_tm.shape
    H = params["w_hh"].shape[0]
    h = jnp.zeros((N, H), jnp.float32)
    c = jnp.zeros((N, H), jnp.float32)
    outs = []
    hi = jax.lax.Precision.HIGHEST
    for t in range(T1):
        gates = (jnp.dot(x_tm[t], params["w_ih"], precision=hi)
                 + jnp.dot(h, params["w_hh"], precision=hi) + params["b"])
        i_g = jax.nn.sigmoid(gates[:, :H])
        f_g = jax.nn.sigmoid(gates[:, H:2 * H])
        g_g = jnp.tanh(gates[:, 2 * H:3 * H])
        o_g = jax.nn.sigmoid(gates[:, 3 * H:])
        c = f_g * c + i_g * g_g
        h = o_g * jnp.tanh(c)
        outs.append(jnp.dot(h, params["w_out"], precision=hi) + params["b_out"])
    full = jnp.stack(outs, 0)
    idx_t, idx_b = [], []
    for t in range(T1):
        for b_i in range(len(lengths)):
            if lengths[b_i] > t:
                idx_t.append(t)
                idx_b.append(b_i)
    return full[jnp.asarray(idx_t), jnp.asarray(idx_b)]


# --------------------------------- main ---------------------------------------

if __name__ == "__main__":
    # Small config consistent with the module: n_tok vocab, dim_embeddings E,
    # sequence length T == E (required by the concat), LSTM hidden H, batch N.
    N, T, E, H, VOCAB = 2, 8, 8, 32, 16
    # TODO(synk): LSTM hidden size / layer count are not specified in __init__
    # (self.lstm / self.linear are never constructed); a 1-layer LSTM(E->H) and
    # Linear(H->n_tok) are assumed.

    key = jax.random.PRNGKey(0)
    k_emb, k_wih, k_whh, k_bih, k_bhh, k_wout, k_bout, k_formula = jax.random.split(key, 8)

    bound = 1.0 / np.sqrt(H)
    params = {
        "embed": jax.random.normal(k_emb, (VOCAB, E), jnp.float32),
        "w_ih": jax.random.uniform(k_wih, (E, 4 * H), jnp.float32, -bound, bound),
        "w_hh": jax.random.uniform(k_whh, (H, 4 * H), jnp.float32, -bound, bound),
        "b": (jax.random.uniform(k_bih, (1, 4 * H), jnp.float32, -bound, bound)
              + jax.random.uniform(k_bhh, (1, 4 * H), jnp.float32, -bound, bound)),
        "w_out": jax.random.uniform(k_wout, (H, VOCAB), jnp.float32, -bound, bound),
        "b_out": jax.random.uniform(k_bout, (1, VOCAB), jnp.float32, -bound, bound),
    }

    formula = jax.random.randint(k_formula, (N, T), 0, VOCAB, jnp.int32)
    lengths = [T + 1, T - 1]   # sorted descending, <= T+1 (pack_padded_sequence contract)

    out = decoder_rnn_forward(params, formula, lengths)
    out = jax.block_until_ready(out)

    ref = jax.block_until_ready(decoder_rnn_ref(params, formula, lengths))
    assert out.shape == (sum(lengths), VOCAB), out.shape
    # Tolerance: kernel matmuls use the default TPU MXU f32 precision while the
    # reference uses Precision.HIGHEST; at E=8/H=32/T1=9 the accumulated drift is
    # well inside 1e-2 (verified empirically on the previous version).
    np.testing.assert_allclose(np.asarray(out), np.asarray(ref), atol=1e-2, rtol=1e-2)

    print("KERNEL_OK")
</pallas_src>

<mosaic_0001>
module attributes {stable_mosaic.version = 11 : i64} {
  func.func @_decoder_lstm_kernel(%arg0: memref<72x8xf32, #tpu.memory_space<vmem>>, %arg1: memref<8x128xf32, #tpu.memory_space<vmem>>, %arg2: memref<32x128xf32, #tpu.memory_space<vmem>>, %arg3: memref<1x128xf32, #tpu.memory_space<vmem>>, %arg4: memref<32x128xf32, #tpu.memory_space<vmem>>, %arg5: memref<1x128xf32, #tpu.memory_space<vmem>>, %arg6: memref<72x128xf32, #tpu.memory_space<vmem>>, %arg7: memref<72x128xf32, #tpu.memory_space<vmem>>, %arg8: memref<72x32xf32, #tpu.memory_space<vmem>>) attributes {dimension_semantics = [], scalar_prefetch = 0 : i64, scratch_operands = 2 : i64, tpu.core_type = #tpu.core_type<tc>} {
    %c0 = arith.constant 0 : index
    %c0_0 = arith.constant 0 : index
    %0 = vector.load %arg0[%c0, %c0_0] : memref<72x8xf32, #tpu.memory_space<vmem>>, vector<72x8xf32>
    %c0_1 = arith.constant 0 : index
    %c0_2 = arith.constant 0 : index
    %1 = vector.load %arg1[%c0_1, %c0_2] : memref<8x128xf32, #tpu.memory_space<vmem>>, vector<8x128xf32>
    %cst = arith.constant dense<0.000000e+00> : vector<72x128xf32>
    %2 = tpu.matmul %0, %1, %cst {dimension_numbers = #tpu.dot_dimension_numbers<[1], [0], [0], [1], [0, 0, 1, 1], [], []>} : vector<72x8xf32>, vector<8x128xf32>, vector<72x128xf32> -> vector<72x128xf32>
    %c0_3 = arith.constant 0 : index
    %c0_4 = arith.constant 0 : index
    %3 = vector.load %arg3[%c0_3, %c0_4] : memref<1x128xf32, #tpu.memory_space<vmem>>, vector<1x128xf32>
    %4 = vector.broadcast %3 : vector<1x128xf32> to vector<72x128xf32>
    %5 = arith.addf %2, %4 : vector<72x128xf32>
    %c0_5 = arith.constant 0 : index
    %c0_6 = arith.constant 0 : index
    %6 = vector.load %arg7[%c0_5, %c0_6] : memref<72x128xf32, #tpu.memory_space<vmem>>, vector<72x128xf32>
    tpu.vector_store %arg7[%c0_5, %c0_6], %5 {strides = array<i32>} : memref<72x128xf32, #tpu.memory_space<vmem>>, vector<72x128xf32>,
    %c0_7 = arith.constant 0 : index
    %c0_8 = arith.constant 0 : index
    %7 = vector.load %arg2[%c0_7, %c0_8] : memref<32x128xf32, #tpu.memory_space<vmem>>, vector<32x128xf32>
    %cst_9 = arith.constant 0.000000e+00 : f32
    %8 = vector.broadcast %cst_9 : f32 to vector<8x32xf32>
    %cst_10 = arith.constant 0.000000e+00 : f32
    %9 = vector.broadcast %cst_10 : f32 to vector<8x32xf32>
    %c0_i32 = arith.constant 0 : i32
    %c8_i32 = arith.constant 8 : i32
    %10 = arith.muli %c0_i32, %c8_i32 : i32
    %11 = tpu.assume_multiple %10, 8 : i32
    %12 = arith.index_cast %11 : i32 to index
    %c0_11 = arith.constant 0 : index
    %13 = vector.load %arg7[%12, %c0_11] : memref<72x128xf32, #tpu.memory_space<vmem>>, vector<8x128xf32>
    %cst_12 = arith.constant dense<0.000000e+00> : vector<8x128xf32>
    %14 = tpu.matmul %8, %7, %cst_12 {dimension_numbers = #tpu.dot_dimension_numbers<[1], [0], [0], [1], [0, 0, 1, 1], [], []>} : vector<8x32xf32>, vector<32x128xf32>, vector<8x128xf32> -> vector<8x128xf32>
    %15 = arith.addf %13, %14 : vector<8x128xf32>
    %16 = vector.extract_strided_slice %15 {offsets = [0, 0], sizes = [8, 96], strides = [1, 1]} : vector<8x128xf32> to vector<8x96xf32>
    %17 = arith.negf %16 : vector<8x96xf32>
    %18 = math.exp %17 : vector<8x96xf32>
    %cst_13 = arith.constant 1.000000e+00 : f32
    %19 = vector.broadcast %cst_13 : f32 to vector<8x96xf32>
    %20 = arith.addf %19, %18 : vector<8x96xf32>
    %21 = arith.divf %19, %20 : vector<8x96xf32>
    %22 = vector.extract_strided_slice %15 {offsets = [0, 96], sizes = [8, 32], strides = [1, 1]} : vector<8x128xf32> to vector<8x32xf32>
    %23 = math.tanh %22 : vector<8x32xf32>
    %24 = vector.extract_strided_slice %21 {offsets = [0, 0], sizes = [8, 32], strides = [1, 1]} : vector<8x96xf32> to vector<8x32xf32>
    %25 = vector.extract_strided_slice %21 {offsets = [0, 32], sizes = [8, 32], strides = [1, 1]} : vector<8x96xf32> to vector<8x32xf32>
    %26 = vector.extract_strided_slice %21 {offsets = [0, 64], sizes = [8, 32], strides = [1, 1]} : vector<8x96xf32> to vector<8x32xf32>
    %27 = arith.mulf %25, %9 : vector<8x32xf32>
    %28 = arith.mulf %24, %23 : vector<8x32xf32>
    %29 = arith.addf %27, %28 : vector<8x32xf32>
    %30 = math.tanh %29 : vector<8x32xf32>
    %31 = arith.mulf %26, %30 : vector<8x32xf32>
    %32 = arith.index_cast %11 : i32 to index
    %c0_14 = arith.constant 0 : index
    %33 = vector.load %arg8[%32, %c0_14] : memref<72x32xf32, #tpu.memory_space<vmem>>, vector<8x32xf32>
    tpu.vector_store %arg8[%32, %c0_14], %31 {strides = array<i32>} : memref<72x32xf32, #tpu.memory_space<vmem>>, vector<8x32xf32>,
    %c1_i32 = arith.constant 1 : i32
    %c8_i32_15 = arith.constant 8 : i32
    %34 = arith.muli %c1_i32, %c8_i32_15 : i32
    %35 = tpu.assume_multiple %34, 8 : i32
    %36 = arith.index_cast %35 : i32 to index
    %c0_16 = arith.constant 0 : index
    %37 = vector.load %arg7[%36, %c0_16] : memref<72x128xf32, #tpu.memory_space<vmem>>, vector<8x128xf32>
    %cst_17 = arith.constant dense<0.000000e+00> : vector<8x128xf32>
    %38 = tpu.matmul %31, %7, %cst_17 {dimension_numbers = #tpu.dot_dimension_numbers<[1], [0], [0], [1], [0, 0, 1, 1], [], []>} : vector<8x32xf32>, vector<32x128xf32>, vector<8x128xf32> -> vector<8x128xf32>
    %39 = arith.addf %37, %38 : vector<8x128xf32>
    %40 = vector.extract_strided_slice %39 {offsets = [0, 0], sizes = [8, 96], strides = [1, 1]} : vector<8x128xf32> to vector<8x96xf32>
    %41 = arith.negf %40 : vector<8x96xf32>
    %42 = math.exp %41 : vector<8x96xf32>
    %cst_18 = arith.constant 1.000000e+00 : f32
    %43 = vector.broadcast %cst_18 : f32 to vector<8x96xf32>
    %44 = arith.addf %43, %42 : vector<8x96xf32>
    %45 = arith.divf %43, %44 : vector<8x96xf32>
    %46 = vector.extract_strided_slice %39 {offsets = [0, 96], sizes = [8, 32], strides = [1, 1]} : vector<8x128xf32> to vector<8x32xf32>
    %47 = math.tanh %46 : vector<8x32xf32>
    %48 = vector.extract_strided_slice %45 {offsets = [0, 0], sizes = [8, 32], strides = [1, 1]} : vector<8x96xf32> to vector<8x32xf32>
    %49 = vector.extract_strided_slice %45 {offsets = [0, 32], sizes = [8, 32], strides = [1, 1]} : vector<8x96xf32> to vector<8x32xf32>
    %50 = vector.extract_strided_slice %45 {offsets = [0, 64], sizes = [8, 32], strides = [1, 1]} : vector<8x96xf32> to vector<8x32xf32>
    %51 = arith.mulf %49, %29 : vector<8x32xf32>
    %52 = arith.mulf %48, %47 : vector<8x32xf32>
    %53 = arith.addf %51, %52 : vector<8x32xf32>
    %54 = math.tanh %53 : vector<8x32xf32>
    %55 = arith.mulf %50, %54 : vector<8x32xf32>
    %56 = arith.index_cast %35 : i32 to index
    %c0_19 = arith.constant 0 : index
    %57 = vector.load %arg8[%56, %c0_19] : memref<72x32xf32, #tpu.memory_space<vmem>>, vector<8x32xf32>
    tpu.vector_store %arg8[%56, %c0_19], %55 {strides = array<i32>} : memref<72x32xf32, #tpu.memory_space<vmem>>, vector<8x32xf32>,
    %c2_i32 = arith.constant 2 : i32
    %c8_i32_20 = arith.constant 8 : i32
    %58 = arith.muli %c2_i32, %c8_i32_20 : i32
    %59 = tpu.assume_multiple %58, 8 : i32
    %60 = arith.index_cast %59 : i32 to index
    %c0_21 = arith.constant 0 : index
    %61 = vector.load %arg7[%60, %c0_21] : memref<72x128xf32, #tpu.memory_space<vmem>>, vector<8x128xf32>
    %cst_22 = arith.constant dense<0.000000e+00> : vector<8x128xf32>
    %62 = tpu.matmul %55, %7, %cst_22 {dimension_numbers = #tpu.dot_dimension_numbers<[1], [0], [0], [1], [0, 0, 1, 1], [], []>} : vector<8x32xf32>, vector<32x128xf32>, vector<8x128xf32> -> vector<8x128xf32>
    %63 = arith.addf %61, %62 : vector<8x128xf32>
    %64 = vector.extract_strided_slice %63 {offsets = [0, 0], sizes = [8, 96], strides = [1, 1]} : vector<8x128xf32> to vector<8x96xf32>
    %65 = arith.negf %64 : vector<8x96xf32>
    %66 = math.exp %65 : vector<8x96xf32>
    %cst_23 = arith.constant 1.000000e+00 : f32
    %67 = vector.broadcast %cst_23 : f32 to vector<8x96xf32>
    %68 = arith.addf %67, %66 : vector<8x96xf32>
    %69 = arith.divf %67, %68 : vector<8x96xf32>
    %70 = vector.extract_strided_slice %63 {offsets = [0, 96], sizes = [8, 32], strides = [1, 1]} : vector<8x128xf32> to vector<8x32xf32>
    %71 = math.tanh %70 : vector<8x32xf32>
    %72 = vector.extract_strided_slice %69 {offsets = [0, 0], sizes = [8, 32], strides = [1, 1]} : vector<8x96xf32> to vector<8x32xf32>
    %73 = vector.extract_strided_slice %69 {offsets = [0, 32], sizes = [8, 32], strides = [1, 1]} : vector<8x96xf32> to vector<8x32xf32>
    %74 = vector.extract_strided_slice %69 {offsets = [0, 64], sizes = [8, 32], strides = [1, 1]} : vector<8x96xf32> to vector<8x32xf32>
    %75 = arith.mulf %73, %53 : vector<8x32xf32>
    %76 = arith.mulf %72, %71 : vector<8x32xf32>
    %77 = arith.addf %75, %76 : vector<8x32xf32>
    %78 = math.tanh %77 : vector<8x32xf32>
    %79 = arith.mulf %74, %78 : vector<8x32xf32>
    %80 = arith.index_cast %59 : i32 to index
    %c0_24 = arith.constant 0 : index
    %81 = vector.load %arg8[%80, %c0_24] : memref<72x32xf32, #tpu.memory_space<vmem>>, vector<8x32xf32>
    tpu.vector_store %arg8[%80, %c0_24], %79 {strides = array<i32>} : memref<72x32xf32, #tpu.memory_space<vmem>>, vector<8x32xf32>,
    %c3_i32 = arith.constant 3 : i32
    %c8_i32_25 = arith.constant 8 : i32
    %82 = arith.muli %c3_i32, %c8_i32_25 : i32
    %83 = tpu.assume_multiple %82, 8 : i32
    %84 = arith.index_cast %83 : i32 to index
    %c0_26 = arith.constant 0 : index
    %85 = vector.load %arg7[%84, %c0_26] : memref<72x128xf32, #tpu.memory_space<vmem>>, vector<8x128xf32>
    %cst_27 = arith.constant dense<0.000000e+00> : vector<8x128xf32>
    %86 = tpu.matmul %79, %7, %cst_27 {dimension_numbers = #tpu.dot_dimension_numbers<[1], [0], [0], [1], [0, 0, 1, 1], [], []>} : vector<8x32xf32>, vector<32x128xf32>, vector<8x128xf32> -> vector<8x128xf32>
    %87 = arith.addf %85, %86 : vector<8x128xf32>
    %88 = vector.extract_strided_slice %87 {offsets = [0, 0], sizes = [8, 96], strides = [1, 1]} : vector<8x128xf32> to vector<8x96xf32>
    %89 = arith.negf %88 : vector<8x96xf32>
    %90 = math.exp %89 : vector<8x96xf32>
    %cst_28 = arith.constant 1.000000e+00 : f32
    %91 = vector.broadcast %cst_28 : f32 to vector<8x96xf32>
    %92 = arith.addf %91, %90 : vector<8x96xf32>
    %93 = arith.divf %91, %92 : vector<8x96xf32>
    %94 = vector.extract_strided_slice %87 {offsets = [0, 96], sizes = [8, 32], strides = [1, 1]} : vector<8x128xf32> to vector<8x32xf32>
    %95 = math.tanh %94 : vector<8x32xf32>
    %96 = vector.extract_strided_slice %93 {offsets = [0, 0], sizes = [8, 32], strides = [1, 1]} : vector<8x96xf32> to vector<8x32xf32>
    %97 = vector.extract_strided_slice %93 {offsets = [0, 32], sizes = [8, 32], strides = [1, 1]} : vector<8x96xf32> to vector<8x32xf32>
    %98 = vector.extract_strided_slice %93 {offsets = [0, 64], sizes = [8, 32], strides = [1, 1]} : vector<8x96xf32> to vector<8x32xf32>
    %99 = arith.mulf %97, %77 : vector<8x32xf32>
    %100 = arith.mulf %96, %95 : vector<8x32xf32>
    %101 = arith.addf %99, %100 : vector<8x32xf32>
    %102 = math.tanh %101 : vector<8x32xf32>
    %103 = arith.mulf %98, %102 : vector<8x32xf32>
    %104 = arith.index_cast %83 : i32 to index
    %c0_29 = arith.constant 0 : index
    %105 = vector.load %arg8[%104, %c0_29] : memref<72x32xf32, #tpu.memory_space<vmem>>, vector<8x32xf32>
    tpu.vector_store %arg8[%104, %c0_29], %103 {strides = array<i32>} : memref<72x32xf32, #tpu.memory_space<vmem>>, vector<8x32xf32>,
    %c4_i32 = arith.constant 4 : i32
    %c8_i32_30 = arith.constant 8 : i32
    %106 = arith.muli %c4_i32, %c8_i32_30 : i32
    %107 = tpu.assume_multiple %106, 8 : i32
    %108 = arith.index_cast %107 : i32 to index
    %c0_31 = arith.constant 0 : index
    %109 = vector.load %arg7[%108, %c0_31] : memref<72x128xf32, #tpu.memory_space<vmem>>, vector<8x128xf32>
    %cst_32 = arith.constant dense<0.000000e+00> : vector<8x128xf32>
    %110 = tpu.matmul %103, %7, %cst_32 {dimension_numbers = #tpu.dot_dimension_numbers<[1], [0], [0], [1], [0, 0, 1, 1], [], []>} : vector<8x32xf32>, vector<32x128xf32>, vector<8x128xf32> -> vector<8x128xf32>
    %111 = arith.addf %109, %110 : vector<8x128xf32>
    %112 = vector.extract_strided_slice %111 {offsets = [0, 0], sizes = [8, 96], strides = [1, 1]} : vector<8x128xf32> to vector<8x96xf32>
    %113 = arith.negf %112 : vector<8x96xf32>
    %114 = math.exp %113 : vector<8x96xf32>
    %cst_33 = arith.constant 1.000000e+00 : f32
    %115 = vector.broadcast %cst_33 : f32 to vector<8x96xf32>
    %116 = arith.addf %115, %114 : vector<8x96xf32>
    %117 = arith.divf %115, %116 : vector<8x96xf32>
    %118 = vector.extract_strided_slice %111 {offsets = [0, 96], sizes = [8, 32], strides = [1, 1]} : vector<8x128xf32> to vector<8x32xf32>
    %119 = math.tanh %118 : vector<8x32xf32>
    %120 = vector.extract_strided_slice %117 {offsets = [0, 0], sizes = [8, 32], strides = [1, 1]} : vector<8x96xf32> to vector<8x32xf32>
    %121 = vector.extract_strided_slice %117 {offsets = [0, 32], sizes = [8, 32], strides = [1, 1]} : vector<8x96xf32> to vector<8x32xf32>
    %122 = vector.extract_strided_slice %117 {offsets = [0, 64], sizes = [8, 32], strides = [1, 1]} : vector<8x96xf32> to vector<8x32xf32>
    %123 = arith.mulf %121, %101 : vector<8x32xf32>
    %124 = arith.mulf %120, %119 : vector<8x32xf32>
    %125 = arith.addf %123, %124 : vector<8x32xf32>
    %126 = math.tanh %125 : vector<8x32xf32>
    %127 = arith.mulf %122, %126 : vector<8x32xf32>
    %128 = arith.index_cast %107 : i32 to index
    %c0_34 = arith.constant 0 : index
    %129 = vector.load %arg8[%128, %c0_34] : memref<72x32xf32, #tpu.memory_space<vmem>>, vector<8x32xf32>
    tpu.vector_store %arg8[%128, %c0_34], %127 {strides = array<i32>} : memref<72x32xf32, #tpu.memory_space<vmem>>, vector<8x32xf32>,
    %c5_i32 = arith.constant 5 : i32
    %c8_i32_35 = arith.constant 8 : i32
    %130 = arith.muli %c5_i32, %c8_i32_35 : i32
    %131 = tpu.assume_multiple %130, 8 : i32
    %132 = arith.index_cast %131 : i32 to index
    %c0_36 = arith.constant 0 : index
    %133 = vector.load %arg7[%132, %c0_36] : memref<72x128xf32, #tpu.memory_space<vmem>>, vector<8x128xf32>
    %cst_37 = arith.constant dense<0.000000e+00> : vector<8x128xf32>
    %134 = tpu.matmul %127, %7, %cst_37 {dimension_numbers = #tpu.dot_dimension_numbers<[1], [0], [0], [1], [0, 0, 1, 1], [], []>} : vector<8x32xf32>, vector<32x128xf32>, vector<8x128xf32> -> vector<8x128xf32>
    %135 = arith.addf %133, %134 : vector<8x128xf32>
    %136 = vector.extract_strided_slice %135 {offsets = [0, 0], sizes = [8, 96], strides = [1, 1]} : vector<8x128xf32> to vector<8x96xf32>
    %137 = arith.negf %136 : vector<8x96xf32>
    %138 = math.exp %137 : vector<8x96xf32>
    %cst_38 = arith.constant 1.000000e+00 : f32
    %139 = vector.broadcast %cst_38 : f32 to vector<8x96xf32>
    %140 = arith.addf %139, %138 : vector<8x96xf32>
    %141 = arith.divf %139, %140 : vector<8x96xf32>
    %142 = vector.extract_strided_slice %135 {offsets = [0, 96], sizes = [8, 32], strides = [1, 1]} : vector<8x128xf32> to vector<8x32xf32>
    %143 = math.tanh %142 : vector<8x32xf32>
    %144 = vector.extract_strided_slice %141 {offsets = [0, 0], sizes = [8, 32], strides = [1, 1]} : vector<8x96xf32> to vector<8x32xf32>
    %145 = vector.extract_strided_slice %141 {offsets = [0, 32], sizes = [8, 32], strides = [1, 1]} : vector<8x96xf32> to vector<8x32xf32>
    %146 = vector.extract_strided_slice %141 {offsets = [0, 64], sizes = [8, 32], strides = [1, 1]} : vector<8x96xf32> to vector<8x32xf32>
    %147 = arith.mulf %145, %125 : vector<8x32xf32>
    %148 = arith.mulf %144, %143 : vector<8x32xf32>
    %149 = arith.addf %147, %148 : vector<8x32xf32>
    %150 = math.tanh %149 : vector<8x32xf32>
    %151 = arith.mulf %146, %150 : vector<8x32xf32>
    %152 = arith.index_cast %131 : i32 to index
    %c0_39 = arith.constant 0 : index
    %153 = vector.load %arg8[%152, %c0_39] : memref<72x32xf32, #tpu.memory_space<vmem>>, vector<8x32xf32>
    tpu.vector_store %arg8[%152, %c0_39], %151 {strides = array<i32>} : memref<72x32xf32, #tpu.memory_space<vmem>>, vector<8x32xf32>,
    %c6_i32 = arith.constant 6 : i32
    %c8_i32_40 = arith.constant 8 : i32
    %154 = arith.muli %c6_i32, %c8_i32_40 : i32
    %155 = tpu.assume_multiple %154, 8 : i32
    %156 = arith.index_cast %155 : i32 to index
    %c0_41 = arith.constant 0 : index
    %157 = vector.load %arg7[%156, %c0_41] : memref<72x128xf32, #tpu.memory_space<vmem>>, vector<8x128xf32>
    %cst_42 = arith.constant dense<0.000000e+00> : vector<8x128xf32>
    %158 = tpu.matmul %151, %7, %cst_42 {dimension_numbers = #tpu.dot_dimension_numbers<[1], [0], [0], [1], [0, 0, 1, 1], [], []>} : vector<8x32xf32>, vector<32x128xf32>, vector<8x128xf32> -> vector<8x128xf32>
    %159 = arith.addf %157, %158 : vector<8x128xf32>
    %160 = vector.extract_strided_slice %159 {offsets = [0, 0], sizes = [8, 96], strides = [1, 1]} : vector<8x128xf32> to vector<8x96xf32>
    %161 = arith.negf %160 : vector<8x96xf32>
    %162 = math.exp %161 : vector<8x96xf32>
    %cst_43 = arith.constant 1.000000e+00 : f32
    %163 = vector.broadcast %cst_43 : f32 to vector<8x96xf32>
    %164 = arith.addf %163, %162 : vector<8x96xf32>
    %165 = arith.divf %163, %164 : vector<8x96xf32>
    %166 = vector.extract_strided_slice %159 {offsets = [0, 96], sizes = [8, 32], strides = [1, 1]} : vector<8x128xf32> to vector<8x32xf32>
    %167 = math.tanh %166 : vector<8x32xf32>
    %168 = vector.extract_strided_slice %165 {offsets = [0, 0], sizes = [8, 32], strides = [1, 1]} : vector<8x96xf32> to vector<8x32xf32>
    %169 = vector.extract_strided_slice %165 {offsets = [0, 32], sizes = [8, 32], strides = [1, 1]} : vector<8x96xf32> to vector<8x32xf32>
    %170 = vector.extract_strided_slice %165 {offsets = [0, 64], sizes = [8, 32], strides = [1, 1]} : vector<8x96xf32> to vector<8x32xf32>
    %171 = arith.mulf %169, %149 : vector<8x32xf32>
    %172 = arith.mulf %168, %167 : vector<8x32xf32>
    %173 = arith.addf %171, %172 : vector<8x32xf32>
    %174 = math.tanh %173 : vector<8x32xf32>
    %175 = arith.mulf %170, %174 : vector<8x32xf32>
    %176 = arith.index_cast %155 : i32 to index
    %c0_44 = arith.constant 0 : index
    %177 = vector.load %arg8[%176, %c0_44] : memref<72x32xf32, #tpu.memory_space<vmem>>, vector<8x32xf32>
    tpu.vector_store %arg8[%176, %c0_44], %175 {strides = array<i32>} : memref<72x32xf32, #tpu.memory_space<vmem>>, vector<8x32xf32>,
    %c7_i32 = arith.constant 7 : i32
    %c8_i32_45 = arith.constant 8 : i32
    %178 = arith.muli %c7_i32, %c8_i32_45 : i32
    %179 = tpu.assume_multiple %178, 8 : i32
    %180 = arith.index_cast %179 : i32 to index
    %c0_46 = arith.constant 0 : index
    %181 = vector.load %arg7[%180, %c0_46] : memref<72x128xf32, #tpu.memory_space<vmem>>, vector<8x128xf32>
    %cst_47 = arith.constant dense<0.000000e+00> : vector<8x128xf32>
    %182 = tpu.matmul %175, %7, %cst_47 {dimension_numbers = #tpu.dot_dimension_numbers<[1], [0], [0], [1], [0, 0, 1, 1], [], []>} : vector<8x32xf32>, vector<32x128xf32>, vector<8x128xf32> -> vector<8x128xf32>
    %183 = arith.addf %181, %182 : vector<8x128xf32>
    %184 = vector.extract_strided_slice %183 {offsets = [0, 0], sizes = [8, 96], strides = [1, 1]} : vector<8x128xf32> to vector<8x96xf32>
    %185 = arith.negf %184 : vector<8x96xf32>
    %186 = math.exp %185 : vector<8x96xf32>
    %cst_48 = arith.constant 1.000000e+00 : f32
    %187 = vector.broadcast %cst_48 : f32 to vector<8x96xf32>
    %188 = arith.addf %187, %186 : vector<8x96xf32>
    %189 = arith.divf %187, %188 : vector<8x96xf32>
    %190 = vector.extract_strided_slice %183 {offsets = [0, 96], sizes = [8, 32], strides = [1, 1]} : vector<8x128xf32> to vector<8x32xf32>
    %191 = math.tanh %190 : vector<8x32xf32>
    %192 = vector.extract_strided_slice %189 {offsets = [0, 0], sizes = [8, 32], strides = [1, 1]} : vector<8x96xf32> to vector<8x32xf32>
    %193 = vector.extract_strided_slice %189 {offsets = [0, 32], sizes = [8, 32], strides = [1, 1]} : vector<8x96xf32> to vector<8x32xf32>
    %194 = vector.extract_strided_slice %189 {offsets = [0, 64], sizes = [8, 32], strides = [1, 1]} : vector<8x96xf32> to vector<8x32xf32>
    %195 = arith.mulf %193, %173 : vector<8x32xf32>
    %196 = arith.mulf %192, %191 : vector<8x32xf32>
    %197 = arith.addf %195, %196 : vector<8x32xf32>
    %198 = math.tanh %197 : vector<8x32xf32>
    %199 = arith.mulf %194, %198 : vector<8x32xf32>
    %200 = arith.index_cast %179 : i32 to index
    %c0_49 = arith.constant 0 : index
    %201 = vector.load %arg8[%200, %c0_49] : memref<72x32xf32, #tpu.memory_space<vmem>>, vector<8x32xf32>
    tpu.vector_store %arg8[%200, %c0_49], %199 {strides = array<i32>} : memref<72x32xf32, #tpu.memory_space<vmem>>, vector<8x32xf32>,
    %c8_i32_50 = arith.constant 8 : i32
    %c8_i32_51 = arith.constant 8 : i32
    %202 = arith.muli %c8_i32_50, %c8_i32_51 : i32
    %203 = tpu.assume_multiple %202, 8 : i32
    %204 = arith.index_cast %203 : i32 to index
    %c0_52 = arith.constant 0 : index
    %205 = vector.load %arg7[%204, %c0_52] : memref<72x128xf32, #tpu.memory_space<vmem>>, vector<8x128xf32>
    %cst_53 = arith.constant dense<0.000000e+00> : vector<8x128xf32>
    %206 = tpu.matmul %199, %7, %cst_53 {dimension_numbers = #tpu.dot_dimension_numbers<[1], [0], [0], [1], [0, 0, 1, 1], [], []>} : vector<8x32xf32>, vector<32x128xf32>, vector<8x128xf32> -> vector<8x128xf32>
    %207 = arith.addf %205, %206 : vector<8x128xf32>
    %208 = vector.extract_strided_slice %207 {offsets = [0, 0], sizes = [8, 96], strides = [1, 1]} : vector<8x128xf32> to vector<8x96xf32>
    %209 = arith.negf %208 : vector<8x96xf32>
    %210 = math.exp %209 : vector<8x96xf32>
    %cst_54 = arith.constant 1.000000e+00 : f32
    %211 = vector.broadcast %cst_54 : f32 to vector<8x96xf32>
    %212 = arith.addf %211, %210 : vector<8x96xf32>
    %213 = arith.divf %211, %212 : vector<8x96xf32>
    %214 = vector.extract_strided_slice %207 {offsets = [0, 96], sizes = [8, 32], strides = [1, 1]} : vector<8x128xf32> to vector<8x32xf32>
    %215 = math.tanh %214 : vector<8x32xf32>
    %216 = vector.extract_strided_slice %213 {offsets = [0, 0], sizes = [8, 32], strides = [1, 1]} : vector<8x96xf32> to vector<8x32xf32>
    %217 = vector.extract_strided_slice %213 {offsets = [0, 32], sizes = [8, 32], strides = [1, 1]} : vector<8x96xf32> to vector<8x32xf32>
    %218 = vector.extract_strided_slice %213 {offsets = [0, 64], sizes = [8, 32], strides = [1, 1]} : vector<8x96xf32> to vector<8x32xf32>
    %219 = arith.mulf %217, %197 : vector<8x32xf32>
    %220 = arith.mulf %216, %215 : vector<8x32xf32>
    %221 = arith.addf %219, %220 : vector<8x32xf32>
    %222 = math.tanh %221 : vector<8x32xf32>
    %223 = arith.mulf %218, %222 : vector<8x32xf32>
    %224 = arith.index_cast %203 : i32 to index
    %c0_55 = arith.constant 0 : index
    %225 = vector.load %arg8[%224, %c0_55] : memref<72x32xf32, #tpu.memory_space<vmem>>, vector<8x32xf32>
    tpu.vector_store %arg8[%224, %c0_55], %223 {strides = array<i32>} : memref<72x32xf32, #tpu.memory_space<vmem>>, vector<8x32xf32>,
    %c9_i32 = arith.constant 9 : i32
    %c0_56 = arith.constant 0 : index
    %c0_57 = arith.constant 0 : index
    %226 = vector.load %arg8[%c0_56, %c0_57] : memref<72x32xf32, #tpu.memory_space<vmem>>, vector<72x32xf32>
    %c0_58 = arith.constant 0 : index
    %c0_59 = arith.constant 0 : index
    %227 = vector.load %arg4[%c0_58, %c0_59] : memref<32x128xf32, #tpu.memory_space<vmem>>, vector<32x128xf32>
    %cst_60 = arith.constant dense<0.000000e+00> : vector<72x128xf32>
    %228 = tpu.matmul %226, %227, %cst_60 {dimension_numbers = #tpu.dot_dimension_numbers<[1], [0], [0], [1], [0, 0, 1, 1], [], []>} : vector<72x32xf32>, vector<32x128xf32>, vector<72x128xf32> -> vector<72x128xf32>
    %c0_61 = arith.constant 0 : index
    %c0_62 = arith.constant 0 : index
    %229 = vector.load %arg5[%c0_61, %c0_62] : memref<1x128xf32, #tpu.memory_space<vmem>>, vector<1x128xf32>
    %230 = vector.broadcast %229 : vector<1x128xf32> to vector<72x128xf32>
    %231 = arith.addf %228, %230 : vector<72x128xf32>
    %c0_63 = arith.constant 0 : index
    %c0_64 = arith.constant 0 : index
    %232 = vector.load %arg6[%c0_63, %c0_64] : memref<72x128xf32, #tpu.memory_space<vmem>>, vector<72x128xf32>
    tpu.vector_store %arg6[%c0_63, %c0_64], %231 {strides = array<i32>} : memref<72x128xf32, #tpu.memory_space<vmem>>, vector<72x128xf32>,
    return
  }
}

</mosaic_0001>

<llo_original>
// kernel: tpu_custom_call.1
$region0: #{tpu_custom_call.1}
  #allocation0 [shape = 'u32[]', space=smem, size = 0x4, offset = 0x4, fixed_abs, tag = 'smem constant byte address 0x4 - core index']
  #allocation1 [shape = 'u32[144,128]{1,0:T(1,128)}', space=vmem, size = 0x12000, scoped, tag = 'internal scratch']
  #allocation2 [shape = 'f32[72,128]{1,0:T(8,128)}', space=vmem, size = 0x9000, scoped, tag = 'scratch operand']
  #allocation3 [shape = 'f32[72,32]{1,0:T(8,128)}', space=vmem, size = 0x9000, scoped, tag = 'scratch operand']
  %s0 = inlined_call_operand.vmem [shape: f32[72,8], index: 0, kind: input, shape index: {}]
  %s1 = inlined_call_operand.vmem [shape: f32[8,128], index: 1, kind: input, shape index: {}]
  %s2 = inlined_call_operand.vmem [shape: f32[32,128], index: 2, kind: input, shape index: {}]
  %s3 = inlined_call_operand.vmem [shape: f32[1,128], index: 3, kind: input, shape index: {}]
  %s4 = inlined_call_operand.vmem [shape: f32[32,128], index: 4, kind: input, shape index: {}]
  %s5 = inlined_call_operand.vmem [shape: f32[1,128], index: 5, kind: input, shape index: {}]
  %s6 = inlined_call_operand.hbm [shape: f32[72,128], index: 6, kind: output, shape index: {}]
  %s7 = sld [smem:[#allocation0]]
  $region34: #{tpu_custom_call.1} parent=0
    _
  %s9 = ssub.s32 1, %s7
  %s10 = scalar_select 0, %s9, %s7
  $region1: #{tpu_custom_call.1} parent=0
    #allocation4 [shape = 'u8[36864]{0}', space=vmem, size = 0x9000, scoped, tag = 'output window, operand 0, single buffered']
    #allocation5 [shape = 's32[1]{0}', space=sflag, size = 0x4, scoped, tag = 'scoped memory for tpu_custom_call.1']
    %11 = vsyncpa [#allocation5], 0
    // Predicated region
    $region2: #{tpu_custom_call.1} parent=1 // pred_check
      _
    $region3: #{tpu_custom_call.1} parent=1 // pred_check_branch
      %13 = sbr.rel (0) target = $region5
    $region4: #{tpu_custom_call.1} parent=1 // pred_region
      _
    $region5: #{tpu_custom_call.1} parent=1 // pred_fallthru
      _
    // Predicated region
    $region6: #{tpu_custom_call.1} parent=1 // pred_check
      _
    $region7: #{tpu_custom_call.1} parent=1 // pred_check_branch
      %15 = sbr.rel (0) target = $region9
    $region8: #{tpu_custom_call.1} parent=1 // pred_region
      _
    $region9: #{tpu_custom_call.1} parent=1 // pred_fallthru
      _
    // Predicated region
    $region10: #{tpu_custom_call.1} parent=1 // pred_check
      _
    $region11: #{tpu_custom_call.1} parent=1 // pred_check_branch
      %17 = sbr.rel (0) target = $region13
    $region12: #{tpu_custom_call.1} parent=1 // pred_region
      _
    $region13: #{tpu_custom_call.1} parent=1 // pred_fallthru
      _
    // Predicated region
    $region14: #{tpu_custom_call.1} parent=1 // pred_check
      _
    $region15: #{tpu_custom_call.1} parent=1 // pred_check_branch
      %19 = sbr.rel (0) target = $region17
    $region16: #{tpu_custom_call.1} parent=1 // pred_region
      _
    $region17: #{tpu_custom_call.1} parent=1 // pred_fallthru
      _
    // Predicated region
    $region18: #{tpu_custom_call.1} parent=1 // pred_check
      _
    $region19: #{tpu_custom_call.1} parent=1 // pred_check_branch
      %21 = sbr.rel (0) target = $region21
    $region20: #{tpu_custom_call.1} parent=1 // pred_region
      _
    $region21: #{tpu_custom_call.1} parent=1 // pred_fallthru
      _
    // Predicated region
    $region22: #{tpu_custom_call.1} parent=1 // pred_check
      _
    $region23: #{tpu_custom_call.1} parent=1 // pred_check_branch
      %23 = sbr.rel (0) target = $region25
    $region24: #{tpu_custom_call.1} parent=1 // pred_region
      _
    $region25: #{tpu_custom_call.1} parent=1 // pred_fallthru
      _
    %v24 = vld [vmem:[%s0] sm:$0xff]
    %v25 = vld [vmem:[%s0 + $0x8] sm:$0xff]
    %v26 = vld [vmem:[%s0 + $0x10] sm:$0xff]
    %v27 = vld [vmem:[%s0 + $0x18] sm:$0xff]
    %v28 = vld [vmem:[%s0 + $0x20] sm:$0xff]
    %v29 = vld [vmem:[%s0 + $0x28] sm:$0xff]
    %v30 = vld [vmem:[%s0 + $0x30] sm:$0xff]
    %v31 = vld [vmem:[%s0 + $0x38] sm:$0xff]
    %v32 = vld [vmem:[%s0 + $0x40] sm:$0xff]
    %v33 = vld [vmem:[%s1] sm:$0xff]
    %v34 = vld [vmem:[%s3] sm:$0x1]
    %v36 = vlaneseq
    %v37 = vshrl.u32 %v36, 7
    %v38 = vsub.s32 0, %v37
    %v39 = vrot.slane %v34, %v38
    %vm41 = vcmask 64512
    %v43 = vsel %vm41, %v24, 0
    %v46 = vsel %vm41, %v25, 0
    %v49 = vsel %vm41, %v26, 0
    %v52 = vsel %vm41, %v27, 0
    %v55 = vsel %vm41, %v28, 0
    %v58 = vsel %vm41, %v29, 0
    %v61 = vsel %vm41, %v30, 0
    %v64 = vsel %vm41, %v31, 0
    %v67 = vsel %vm41, %v32, 0
    %69 = vmatprep.subr.mxu0 0.0
    %70 = vmatpush1.msra.mxu0 %v33
    %71 = vmatprep.subr.mxu0 0.0
    %72 = vmatpush1.msra.mxu0 0.0
    %73 = vmatprep.subr.mxu0 0.0
    %74 = vmatpush1.msra.mxu0 0.0
    %75 = vmatprep.subr.mxu0 0.0
    %76 = vmatpush1.msra.mxu0 0.0
    %77 = vmatprep.subr.mxu0 0.0
    %78 = vmatpush1.msra.mxu0 0.0
    %79 = vmatprep.subr.mxu0 0.0
    %80 = vmatpush1.msra.mxu0 0.0
    %81 = vmatprep.subr.mxu0 0.0
    %82 = vmatpush1.msra.mxu0 0.0
    %83 = vmatprep.subr.mxu0 0.0
    %84 = vmatpush1.msra.mxu0 0.0
    %85 = vmatprep.subr.mxu0 0.0
    %86 = vmatpush1.msra.mxu0 0.0
    %87 = vmatprep.subr.mxu0 0.0
    %88 = vmatpush1.msra.mxu0 0.0
    %89 = vmatprep.subr.mxu0 0.0
    %90 = vmatpush1.msra.mxu0 0.0
    %91 = vmatprep.subr.mxu0 0.0
    %92 = vmatpush1.msra.mxu0 0.0
    %93 = vmatprep.subr.mxu0 0.0
    %94 = vmatpush1.msra.mxu0 0.0
    %95 = vmatprep.subr.mxu0 0.0
    %96 = vmatpush1.msra.mxu0 0.0
    %97 = vmatprep.subr.mxu0 0.0
    %98 = vmatpush1.msra.mxu0 0.0
    %99 = vmatprep.subr.mxu0 0.0
    %100 = vmatpush1.msra.mxu0 0.0
    %101 = vmatprep.subr.mxu0 0.0
    %102 = vmatpush1.msra.mxu0 0.0
    %103 = vmatprep.subr.mxu0 0.0
    %104 = vmatpush1.msra.mxu0 0.0
    %105 = vmatprep.subr.mxu0 0.0
    %106 = vmatpush1.msra.mxu0 0.0
    %107 = vmatprep.subr.mxu0 0.0
    %108 = vmatpush1.msra.mxu0 0.0
    %109 = vmatprep.subr.mxu0 0.0
    %110 = vmatpush1.msra.mxu0 0.0
    %111 = vmatprep.subr.mxu0 0.0
    %112 = vmatpush1.msra.mxu0 0.0
    %113 = vmatprep.subr.mxu0 0.0
    %114 = vmatpush1.msra.mxu0 0.0
    %115 = vmatprep.subr.mxu0 0.0
    %116 = vmatpush1.msra.mxu0 0.0
    %117 = vmatprep.subr.mxu0 0.0
    %118 = vmatpush1.msra.mxu0 0.0
    %119 = vmatprep.subr.mxu0 0.0
    %120 = vmatpush1.msra.mxu0 0.0
    %121 = vmatprep.subr.mxu0 0.0
    %122 = vmatpush1.msra.mxu0 0.0
    %123 = vmatprep.subr.mxu0 0.0
    %124 = vmatpush1.msra.mxu0 0.0
    %125 = vmatprep.subr.mxu0 0.0
    %126 = vmatpush1.msra.mxu0 0.0
    %127 = vmatprep.subr.mxu0 0.0
    %128 = vmatpush1.msra.mxu0 0.0
    %129 = vmatprep.subr.mxu0 0.0
    %130 = vmatpush1.msra.mxu0 0.0
    %131 = vmatprep.subr.mxu0 0.0
    %132 = vmatpush1.msra.mxu0 0.0
    %133 = vmatprep.mubr.f32.mxu0 0.0
    %134 = vmatmul.mubr.f32.gmra.mrb[0].mxu0 %v43
    %v135 = vpop.f32.mrb[0].mxu0
    %v136 = vadd.f32 %v39, %v135
    %v137 = vpop.f32.mrb[0].mxu0
    %138 = vmatprep.mubr.f32.mxu0 0.0
    %139 = vmatmul.mubr.f32.gmra.mrb[0].mxu0 %v46
    %v140 = vpop.f32.mrb[0].mxu0
    %v141 = vadd.f32 %v39, %v140
    %v142 = vpop.f32.mrb[0].mxu0
    %143 = vmatprep.mubr.f32.mxu0 0.0
    %144 = vmatmul.mubr.f32.gmra.mrb[0].mxu0 %v49
    %v145 = vpop.f32.mrb[0].mxu0
    %v146 = vadd.f32 %v39, %v145
    %v147 = vpop.f32.mrb[0].mxu0
    %148 = vmatprep.mubr.f32.mxu0 0.0
    %149 = vmatmul.mubr.f32.gmra.mrb[0].mxu0 %v52
    %v150 = vpop.f32.mrb[0].mxu0
    %v151 = vadd.f32 %v39, %v150
    %v152 = vpop.f32.mrb[0].mxu0
    %153 = vmatprep.mubr.f32.mxu0 0.0
    %154 = vmatmul.mubr.f32.gmra.mrb[0].mxu0 %v55
    %v155 = vpop.f32.mrb[0].mxu0
    %v156 = vadd.f32 %v39, %v155
    %v157 = vpop.f32.mrb[0].mxu0
    %158 = vmatprep.mubr.f32.mxu0 0.0
    %159 = vmatmul.mubr.f32.gmra.mrb[0].mxu0 %v58
    %v160 = vpop.f32.mrb[0].mxu0
    %v161 = vadd.f32 %v39, %v160
    %v162 = vpop.f32.mrb[0].mxu0
    %163 = vmatprep.mubr.f32.mxu0 0.0
    %164 = vmatmul.mubr.f32.gmra.mrb[0].mxu0 %v61
    %v165 = vpop.f32.mrb[0].mxu0
    %v166 = vadd.f32 %v39, %v165
    %v167 = vpop.f32.mrb[0].mxu0
    %168 = vmatprep.mubr.f32.mxu0 0.0
    %169 = vmatmul.mubr.f32.gmra.mrb[0].mxu0 %v64
    %v170 = vpop.f32.mrb[0].mxu0
    %v171 = vadd.f32 %v39, %v170
    %v172 = vpop.f32.mrb[0].mxu0
    %173 = vmatprep.mubr.f32.mxu0 0.0
    %174 = vmatmul.mubr.f32.gmra.mrb[0].mxu0 %v67
    %v175 = vpop.f32.mrb[0].mxu0
    %v176 = vadd.f32 %v39, %v175
    %v177 = vpop.f32.mrb[0].mxu0
    %178 = vdwg.mxu0
    %179 = vst [vmem:[#allocation2] sm:$0xff] %v136
    %180 = vst [vmem:[#allocation2 + $0x8] sm:$0xff] %v141
    %181 = vst [vmem:[#allocation2 + $0x10] sm:$0xff] %v146
    %182 = vst [vmem:[#allocation2 + $0x18] sm:$0xff] %v151
    %183 = vst [vmem:[#allocation2 + $0x20] sm:$0xff] %v156
    %184 = vst [vmem:[#allocation2 + $0x28] sm:$0xff] %v161
    %185 = vst [vmem:[#allocation2 + $0x30] sm:$0xff] %v166
    %186 = vst [vmem:[#allocation2 + $0x38] sm:$0xff] %v171
    %187 = vst [vmem:[#allocation2 + $0x40] sm:$0xff] %v176
    %v188 = vld [vmem:[%s2] sm:$0xff]
    %v189 = vld [vmem:[%s2 + $0x8] sm:$0xff]
    %v190 = vld [vmem:[%s2 + $0x10] sm:$0xff]
    %v191 = vld [vmem:[%s2 + $0x18] sm:$0xff]
    %v192 = vld [vmem:[#allocation2] sm:$0xff]
    %vm193 = vcmask 261120
    %v195 = vsel %vm193, 0.0, 0
    %197 = vmatprep.subr.mxu0 0.0
    %198 = vmatpush1.msra.mxu0 %v188
    %199 = vmatprep.subr.mxu0 0.0
    %200 = vmatpush1.msra.mxu0 %v189
    %201 = vmatprep.subr.mxu0 0.0
    %202 = vmatpush1.msra.mxu0 %v190
    %203 = vmatprep.subr.mxu0 0.0
    %204 = vmatpush1.msra.mxu0 %v191
    %205 = vmatprep.subr.mxu0 0.0
    %206 = vmatpush1.msra.mxu0 0.0
    %207 = vmatprep.subr.mxu0 0.0
    %208 = vmatpush1.msra.mxu0 0.0
    %209 = vmatprep.subr.mxu0 0.0
    %210 = vmatpush1.msra.mxu0 0.0
    %211 = vmatprep.subr.mxu0 0.0
    %212 = vmatpush1.msra.mxu0 0.0
    %213 = vmatprep.subr.mxu0 0.0
    %214 = vmatpush1.msra.mxu0 0.0
    %215 = vmatprep.subr.mxu0 0.0
    %216 = vmatpush1.msra.mxu0 0.0
    %217 = vmatprep.subr.mxu0 0.0
    %218 = vmatpush1.msra.mxu0 0.0
    %219 = vmatprep.subr.mxu0 0.0
    %220 = vmatpush1.msra.mxu0 0.0
    %221 = vmatprep.subr.mxu0 0.0
    %222 = vmatpush1.msra.mxu0 0.0
    %223 = vmatprep.subr.mxu0 0.0
    %224 = vmatpush1.msra.mxu0 0.0
    %225 = vmatprep.subr.mxu0 0.0
    %226 = vmatpush1.msra.mxu0 0.0
    %227 = vmatprep.subr.mxu0 0.0
    %228 = vmatpush1.msra.mxu0 0.0
    %229 = vmatprep.subr.mxu0 0.0
    %230 = vmatpush1.msra.mxu0 0.0
    %231 = vmatprep.subr.mxu0 0.0
    %232 = vmatpush1.msra.mxu0 0.0
    %233 = vmatprep.subr.mxu0 0.0
    %234 = vmatpush1.msra.mxu0 0.0
    %235 = vmatprep.subr.mxu0 0.0
    %236 = vmatpush1.msra.mxu0 0.0
    %237 = vmatprep.subr.mxu0 0.0
    %238 = vmatpush1.msra.mxu0 0.0
    %239 = vmatprep.subr.mxu0 0.0
    %240 = vmatpush1.msra.mxu0 0.0
    %241 = vmatprep.subr.mxu0 0.0
    %242 = vmatpush1.msra.mxu0 0.0
    %243 = vmatprep.subr.mxu0 0.0
    %244 = vmatpush1.msra.mxu0 0.0
    %245 = vmatprep.subr.mxu0 0.0
    %246 = vmatpush1.msra.mxu0 0.0
    %247 = vmatprep.subr.mxu0 0.0
    %248 = vmatpush1.msra.mxu0 0.0
    %249 = vmatprep.subr.mxu0 0.0
    %250 = vmatpush1.msra.mxu0 0.0
    %251 = vmatprep.subr.mxu0 0.0
    %252 = vmatpush1.msra.mxu0 0.0
    %253 = vmatprep.subr.mxu0 0.0
    %254 = vmatpush1.msra.mxu0 0.0
    %255 = vmatprep.subr.mxu0 0.0
    %256 = vmatpush1.msra.mxu0 0.0
    %257 = vmatprep.subr.mxu0 0.0
    %258 = vmatpush1.msra.mxu0 0.0
    %259 = vmatprep.subr.mxu0 0.0
    %260 = vmatpush1.msra.mxu0 0.0
    %261 = vmatprep.mubr.f32.mxu0 0.0
    %262 = vmatmul.mubr.f32.gmra.mrb[0].mxu0 %v195
    %v263 = vpop.f32.mrb[0].mxu0
    %v264 = vadd.f32 0.0, %v263
    %v265 = vpop.f32.mrb[0].mxu0
    %266 = vdwg.mxu0
    %v267 = vadd.f32 %v192, %v264
    %v268 = vxor.u32 %v267, 2147483648
    %v269 = vmul.f32 %v268, 1.442695
    %v270 = vpow.pop %v269
    %v271 = vadd.f32 %v270, 1.0
    %v272 = vrcp.pop %v271
    %v273 = vmul.f32 1.0, %v272
    %v274 = vtanh.pop %v267
    %v275 = vmul.f32 %v273, 0.0
    %277 = vrot.lane.b32.xlu0 %v274, 32
    %v278 = vpop.permute.xlu0 %277
    %v280 = vmul.f32 %v273, %v278
    %282 = vrot.lane.b32.xlu0 %v280, 32
    %v283 = vpop.permute.xlu0 %282
    %v285 = vadd.f32 %v275, %v283
    %v286 = vtanh.pop %v285
    %288 = vrot.lane.b32.xlu0 %v286, 32
    %v289 = vpop.permute.xlu0 %288
    %v291 = vmul.f32 %v273, %v289
    %293 = vrot.lane.b32.xlu0 %v291, 64
    %v294 = vpop.permute.xlu0 %293
    %296 = vst.msk [vmem:[#allocation3] sm:$0xff] %vm193, %v294
    %s297 = scalar_lea.vmem [#allocation2], 8
    %v298 = vld [vmem:[%s297] sm:$0xff]
    %v299 = vsel %vm193, %v294, 0
    %301 = vmatprep.subr.mxu0 0.0
    %302 = vmatpush1.msra.mxu0 %v188
    %303 = vmatprep.subr.mxu0 0.0
    %304 = vmatpush1.msra.mxu0 %v189
    %305 = vmatprep.subr.mxu0 0.0
    %306 = vmatpush1.msra.mxu0 %v190
    %307 = vmatprep.subr.mxu0 0.0
    %308 = vmatpush1.msra.mxu0 %v191
    %309 = vmatprep.subr.mxu0 0.0
    %310 = vmatpush1.msra.mxu0 0.0
    %311 = vmatprep.subr.mxu0 0.0
    %312 = vmatpush1.msra.mxu0 0.0
    %313 = vmatprep.subr.mxu0 0.0
    %314 = vmatpush1.msra.mxu0 0.0
    %315 = vmatprep.subr.mxu0 0.0
    %316 = vmatpush1.msra.mxu0 0.0
    %317 = vmatprep.subr.mxu0 0.0
    %318 = vmatpush1.msra.mxu0 0.0
    %319 = vmatprep.subr.mxu0 0.0
    %320 = vmatpush1.msra.mxu0 0.0
    %321 = vmatprep.subr.mxu0 0.0
    %322 = vmatpush1.msra.mxu0 0.0
    %323 = vmatprep.subr.mxu0 0.0
    %324 = vmatpush1.msra.mxu0 0.0
    %325 = vmatprep.subr.mxu0 0.0
    %326 = vmatpush1.msra.mxu0 0.0
    %327 = vmatprep.subr.mxu0 0.0
    %328 = vmatpush1.msra.mxu0 0.0
    %329 = vmatprep.subr.mxu0 0.0
    %330 = vmatpush1.msra.mxu0 0.0
    %331 = vmatprep.subr.mxu0 0.0
    %332 = vmatpush1.msra.mxu0 0.0
    %333 = vmatprep.subr.mxu0 0.0
    %334 = vmatpush1.msra.mxu0 0.0
    %335 = vmatprep.subr.mxu0 0.0
    %336 = vmatpush1.msra.mxu0 0.0
    %337 = vmatprep.subr.mxu0 0.0
    %338 = vmatpush1.msra.mxu0 0.0
    %339 = vmatprep.subr.mxu0 0.0
    %340 = vmatpush1.msra.mxu0 0.0
    %341 = vmatprep.subr.mxu0 0.0
    %342 = vmatpush1.msra.mxu0 0.0
    %343 = vmatprep.subr.mxu0 0.0
    %344 = vmatpush1.msra.mxu0 0.0
    %345 = vmatprep.subr.mxu0 0.0
    %346 = vmatpush1.msra.mxu0 0.0
    %347 = vmatprep.subr.mxu0 0.0
    %348 = vmatpush1.msra.mxu0 0.0
    %349 = vmatprep.subr.mxu0 0.0
    %350 = vmatpush1.msra.mxu0 0.0
    %351 = vmatprep.subr.mxu0 0.0
    %352 = vmatpush1.msra.mxu0 0.0
    %353 = vmatprep.subr.mxu0 0.0
    %354 = vmatpush1.msra.mxu0 0.0
    %355 = vmatprep.subr.mxu0 0.0
    %356 = vmatpush1.msra.mxu0 0.0
    %357 = vmatprep.subr.mxu0 0.0
    %358 = vmatpush1.msra.mxu0 0.0
    %359 = vmatprep.subr.mxu0 0.0
    %360 = vmatpush1.msra.mxu0 0.0
    %361 = vmatprep.subr.mxu0 0.0
    %362 = vmatpush1.msra.mxu0 0.0
    %363 = vmatprep.subr.mxu0 0.0
    %364 = vmatpush1.msra.mxu0 0.0
    %365 = vmatprep.mubr.f32.mxu0 0.0
    %366 = vmatmul.mubr.f32.gmra.mrb[0].mxu0 %v299
    %v367 = vpop.f32.mrb[0].mxu0
    %v368 = vadd.f32 0.0, %v367
    %v369 = vpop.f32.mrb[0].mxu0
    %370 = vdwg.mxu0
    %v371 = vadd.f32 %v298, %v368
    %v372 = vxor.u32 %v371, 2147483648
    %v373 = vmul.f32 %v372, 1.442695
    %v374 = vpow.pop %v373
    %v375 = vadd.f32 %v374, 1.0
    %v376 = vrcp.pop %v375
    %v377 = vmul.f32 1.0, %v376
    %v378 = vtanh.pop %v371
    %v379 = vmul.f32 %v377, %v285
    %381 = vrot.lane.b32.xlu0 %v378, 32
    %v382 = vpop.permute.xlu0 %381
    %v384 = vmul.f32 %v377, %v382
    %386 = vrot.lane.b32.xlu0 %v384, 32
    %v387 = vpop.permute.xlu0 %386
    %v389 = vadd.f32 %v379, %v387
    %v390 = vtanh.pop %v389
    %392 = vrot.lane.b32.xlu0 %v390, 32
    %v393 = vpop.permute.xlu0 %392
    %v395 = vmul.f32 %v377, %v393
    %397 = vrot.lane.b32.xlu0 %v395, 64
    %v398 = vpop.permute.xlu0 %397
    %s400 = scalar_lea.vmem [#allocation3], 8
    %401 = vst.msk [vmem:[%s400] sm:$0xff] %vm193, %v398
    %s402 = scalar_lea.vmem [#allocation2], 16
    %v403 = vld [vmem:[%s402] sm:$0xff]
    %v404 = vsel %vm193, %v398, 0
    %406 = vmatprep.subr.mxu0 0.0
    %407 = vmatpush1.msra.mxu0 %v188
    %408 = vmatprep.subr.mxu0 0.0
    %409 = vmatpush1.msra.mxu0 %v189
    %410 = vmatprep.subr.mxu0 0.0
    %411 = vmatpush1.msra.mxu0 %v190
    %412 = vmatprep.subr.mxu0 0.0
    %413 = vmatpush1.msra.mxu0 %v191
    %414 = vmatprep.subr.mxu0 0.0
    %415 = vmatpush1.msra.mxu0 0.0
    %416 = vmatprep.subr.mxu0 0.0
    %417 = vmatpush1.msra.mxu0 0.0
    %418 = vmatprep.subr.mxu0 0.0
    %419 = vmatpush1.msra.mxu0 0.0
    %420 = vmatprep.subr.mxu0 0.0
    %421 = vmatpush1.msra.mxu0 0.0
    %422 = vmatprep.subr.mxu0 0.0
    %423 = vmatpush1.msra.mxu0 0.0
    %424 = vmatprep.subr.mxu0 0.0
    %425 = vmatpush1.msra.mxu0 0.0
    %426 = vmatprep.subr.mxu0 0.0
    %427 = vmatpush1.msra.mxu0 0.0
    %428 = vmatprep.subr.mxu0 0.0
    %429 = vmatpush1.msra.mxu0 0.0
    %430 = vmatprep.subr.mxu0 0.0
    %431 = vmatpush1.msra.mxu0 0.0
    %432 = vmatprep.subr.mxu0 0.0
    %433 = vmatpush1.msra.mxu0 0.0
    %434 = vmatprep.subr.mxu0 0.0
    %435 = vmatpush1.msra.mxu0 0.0
    %436 = vmatprep.subr.mxu0 0.0
    %437 = vmatpush1.msra.mxu0 0.0
    %438 = vmatprep.subr.mxu0 0.0
    %439 = vmatpush1.msra.mxu0 0.0
    %440 = vmatprep.subr.mxu0 0.0
    %441 = vmatpush1.msra.mxu0 0.0
    %442 = vmatprep.subr.mxu0 0.0
    %443 = vmatpush1.msra.mxu0 0.0
    %444 = vmatprep.subr.mxu0 0.0
    %445 = vmatpush1.msra.mxu0 0.0
    %446 = vmatprep.subr.mxu0 0.0
    %447 = vmatpush1.msra.mxu0 0.0
    %448 = vmatprep.subr.mxu0 0.0
    %449 = vmatpush1.msra.mxu0 0.0
    %450 = vmatprep.subr.mxu0 0.0
    %451 = vmatpush1.msra.mxu0 0.0
    %452 = vmatprep.subr.mxu0 0.0
    %453 = vmatpush1.msra.mxu0 0.0
    %454 = vmatprep.subr.mxu0 0.0
    %455 = vmatpush1.msra.mxu0 0.0
    %456 = vmatprep.subr.mxu0 0.0
    %457 = vmatpush1.msra.mxu0 0.0
    %458 = vmatprep.subr.mxu0 0.0
    %459 = vmatpush1.msra.mxu0 0.0
    %460 = vmatprep.subr.mxu0 0.0
    %461 = vmatpush1.msra.mxu0 0.0
    %462 = vmatprep.subr.mxu0 0.0
    %463 = vmatpush1.msra.mxu0 0.0
    %464 = vmatprep.subr.mxu0 0.0
    %465 = vmatpush1.msra.mxu0 0.0
    %466 = vmatprep.subr.mxu0 0.0
    %467 = vmatpush1.msra.mxu0 0.0
    %468 = vmatprep.subr.mxu0 0.0
    %469 = vmatpush1.msra.mxu0 0.0
    %470 = vmatprep.mubr.f32.mxu0 0.0
    %471 = vmatmul.mubr.f32.gmra.mrb[0].mxu0 %v404
    %v472 = vpop.f32.mrb[0].mxu0
    %v473 = vadd.f32 0.0, %v472
    %v474 = vpop.f32.mrb[0].mxu0
    %475 = vdwg.mxu0
    %v476 = vadd.f32 %v403, %v473
    %v477 = vxor.u32 %v476, 2147483648
    %v478 = vmul.f32 %v477, 1.442695
    %v479 = vpow.pop %v478
    %v480 = vadd.f32 %v479, 1.0
    %v481 = vrcp.pop %v480
    %v482 = vmul.f32 1.0, %v481
    %v483 = vtanh.pop %v476
    %v484 = vmul.f32 %v482, %v389
    %486 = vrot.lane.b32.xlu0 %v483, 32
    %v487 = vpop.permute.xlu0 %486
    %v489 = vmul.f32 %v482, %v487
    %491 = vrot.lane.b32.xlu0 %v489, 32
    %v492 = vpop.permute.xlu0 %491
    %v494 = vadd.f32 %v484, %v492
    %v495 = vtanh.pop %v494
    %497 = vrot.lane.b32.xlu0 %v495, 32
    %v498 = vpop.permute.xlu0 %497
    %v500 = vmul.f32 %v482, %v498
    %502 = vrot.lane.b32.xlu0 %v500, 64
    %v503 = vpop.permute.xlu0 %502
    %s505 = scalar_lea.vmem [#allocation3], 16
    %506 = vst.msk [vmem:[%s505] sm:$0xff] %vm193, %v503
    %s507 = scalar_lea.vmem [#allocation2], 24
    %v508 = vld [vmem:[%s507] sm:$0xff]
    %v509 = vsel %vm193, %v503, 0
    %511 = vmatprep.subr.mxu0 0.0
    %512 = vmatpush1.msra.mxu0 %v188
    %513 = vmatprep.subr.mxu0 0.0
    %514 = vmatpush1.msra.mxu0 %v189
    %515 = vmatprep.subr.mxu0 0.0
    %516 = vmatpush1.msra.mxu0 %v190
    %517 = vmatprep.subr.mxu0 0.0
    %518 = vmatpush1.msra.mxu0 %v191
    %519 = vmatprep.subr.mxu0 0.0
    %520 = vmatpush1.msra.mxu0 0.0
    %521 = vmatprep.subr.mxu0 0.0
    %522 = vmatpush1.msra.mxu0 0.0
    %523 = vmatprep.subr.mxu0 0.0
    %524 = vmatpush1.msra.mxu0 0.0
    %525 = vmatprep.subr.mxu0 0.0
    %526 = vmatpush1.msra.mxu0 0.0
    %527 = vmatprep.subr.mxu0 0.0
    %528 = vmatpush1.msra.mxu0 0.0
    %529 = vmatprep.subr.mxu0 0.0
    %530 = vmatpush1.msra.mxu0 0.0
    %531 = vmatprep.subr.mxu0 0.0
    %532 = vmatpush1.msra.mxu0 0.0
    %533 = vmatprep.subr.mxu0 0.0
    %534 = vmatpush1.msra.mxu0 0.0
    %535 = vmatprep.subr.mxu0 0.0
    %536 = vmatpush1.msra.mxu0 0.0
    %537 = vmatprep.subr.mxu0 0.0
    %538 = vmatpush1.msra.mxu0 0.0
    %539 = vmatprep.subr.mxu0 0.0
    %540 = vmatpush1.msra.mxu0 0.0
    %541 = vmatprep.subr.mxu0 0.0
    %542 = vmatpush1.msra.mxu0 0.0
    %543 = vmatprep.subr.mxu0 0.0
    %544 = vmatpush1.msra.mxu0 0.0
    %545 = vmatprep.subr.mxu0 0.0
    %546 = vmatpush1.msra.mxu0 0.0
    %547 = vmatprep.subr.mxu0 0.0
    %548 = vmatpush1.msra.mxu0 0.0
    %549 = vmatprep.subr.mxu0 0.0
    %550 = vmatpush1.msra.mxu0 0.0
    %551 = vmatprep.subr.mxu0 0.0
    %552 = vmatpush1.msra.mxu0 0.0
    %553 = vmatprep.subr.mxu0 0.0
    %554 = vmatpush1.msra.mxu0 0.0
    %555 = vmatprep.subr.mxu0 0.0
    %556 = vmatpush1.msra.mxu0 0.0
    %557 = vmatprep.subr.mxu0 0.0
    %558 = vmatpush1.msra.mxu0 0.0
    %559 = vmatprep.subr.mxu0 0.0
    %560 = vmatpush1.msra.mxu0 0.0
    %561 = vmatprep.subr.mxu0 0.0
    %562 = vmatpush1.msra.mxu0 0.0
    %563 = vmatprep.subr.mxu0 0.0
    %564 = vmatpush1.msra.mxu0 0.0
    %565 = vmatprep.subr.mxu0 0.0
    %566 = vmatpush1.msra.mxu0 0.0
    %567 = vmatprep.subr.mxu0 0.0
    %568 = vmatpush1.msra.mxu0 0.0
    %569 = vmatprep.subr.mxu0 0.0
    %570 = vmatpush1.msra.mxu0 0.0
    %571 = vmatprep.subr.mxu0 0.0
    %572 = vmatpush1.msra.mxu0 0.0
    %573 = vmatprep.subr.mxu0 0.0
    %574 = vmatpush1.msra.mxu0 0.0
    %575 = vmatprep.mubr.f32.mxu0 0.0
    %576 = vmatmul.mubr.f32.gmra.mrb[0].mxu0 %v509
    %v577 = vpop.f32.mrb[0].mxu0
    %v578 = vadd.f32 0.0, %v577
    %v579 = vpop.f32.mrb[0].mxu0
    %580 = vdwg.mxu0
    %v581 = vadd.f32 %v508, %v578
    %v582 = vxor.u32 %v581, 2147483648
    %v583 = vmul.f32 %v582, 1.442695
    %v584 = vpow.pop %v583
    %v585 = vadd.f32 %v584, 1.0
    %v586 = vrcp.pop %v585
    %v587 = vmul.f32 1.0, %v586
    %v588 = vtanh.pop %v581
    %v589 = vmul.f32 %v587, %v494
    %591 = vrot.lane.b32.xlu0 %v588, 32
    %v592 = vpop.permute.xlu0 %591
    %v594 = vmul.f32 %v587, %v592
    %596 = vrot.lane.b32.xlu0 %v594, 32
    %v597 = vpop.permute.xlu0 %596
    %v599 = vadd.f32 %v589, %v597
    %v600 = vtanh.pop %v599
    %602 = vrot.lane.b32.xlu0 %v600, 32
    %v603 = vpop.permute.xlu0 %602
    %v605 = vmul.f32 %v587, %v603
    %607 = vrot.lane.b32.xlu0 %v605, 64
    %v608 = vpop.permute.xlu0 %607
    %s610 = scalar_lea.vmem [#allocation3], 24
    %611 = vst.msk [vmem:[%s610] sm:$0xff] %vm193, %v608
    %s612 = scalar_lea.vmem [#allocation2], 32
    %v613 = vld [vmem:[%s612] sm:$0xff]
    %v614 = vsel %vm193, %v608, 0
    %616 = vmatprep.subr.mxu0 0.0
    %617 = vmatpush1.msra.mxu0 %v188
    %618 = vmatprep.subr.mxu0 0.0
    %619 = vmatpush1.msra.mxu0 %v189
    %620 = vmatprep.subr.mxu0 0.0
    %621 = vmatpush1.msra.mxu0 %v190
    %622 = vmatprep.subr.mxu0 0.0
    %623 = vmatpush1.msra.mxu0 %v191
    %624 = vmatprep.subr.mxu0 0.0
    %625 = vmatpush1.msra.mxu0 0.0
    %626 = vmatprep.subr.mxu0 0.0
    %627 = vmatpush1.msra.mxu0 0.0
    %628 = vmatprep.subr.mxu0 0.0
    %629 = vmatpush1.msra.mxu0 0.0
    %630 = vmatprep.subr.mxu0 0.0
    %631 = vmatpush1.msra.mxu0 0.0
    %632 = vmatprep.subr.mxu0 0.0
    %633 = vmatpush1.msra.mxu0 0.0
    %634 = vmatprep.subr.mxu0 0.0
    %635 = vmatpush1.msra.mxu0 0.0
    %636 = vmatprep.subr.mxu0 0.0
    %637 = vmatpush1.msra.mxu0 0.0
    %638 = vmatprep.subr.mxu0 0.0
    %639 = vmatpush1.msra.mxu0 0.0
    %640 = vmatprep.subr.mxu0 0.0
    %641 = vmatpush1.msra.mxu0 0.0
    %642 = vmatprep.subr.mxu0 0.0
    %643 = vmatpush1.msra.mxu0 0.0
    %644 = vmatprep.subr.mxu0 0.0
    %645 = vmatpush1.msra.mxu0 0.0
    %646 = vmatprep.subr.mxu0 0.0
    %647 = vmatpush1.msra.mxu0 0.0
    %648 = vmatprep.subr.mxu0 0.0
    %649 = vmatpush1.msra.mxu0 0.0
    %650 = vmatprep.subr.mxu0 0.0
    %651 = vmatpush1.msra.mxu0 0.0
    %652 = vmatprep.subr.mxu0 0.0
    %653 = vmatpush1.msra.mxu0 0.0
    %654 = vmatprep.subr.mxu0 0.0
    %655 = vmatpush1.msra.mxu0 0.0
    %656 = vmatprep.subr.mxu0 0.0
    %657 = vmatpush1.msra.mxu0 0.0
    %658 = vmatprep.subr.mxu0 0.0
    %659 = vmatpush1.msra.mxu0 0.0
    %660 = vmatprep.subr.mxu0 0.0
    %661 = vmatpush1.msra.mxu0 0.0
    %662 = vmatprep.subr.mxu0 0.0
    %663 = vmatpush1.msra.mxu0 0.0
    %664 = vmatprep.subr.mxu0 0.0
    %665 = vmatpush1.msra.mxu0 0.0
    %666 = vmatprep.subr.mxu0 0.0
    %667 = vmatpush1.msra.mxu0 0.0
    %668 = vmatprep.subr.mxu0 0.0
    %669 = vmatpush1.msra.mxu0 0.0
    %670 = vmatprep.subr.mxu0 0.0
    %671 = vmatpush1.msra.mxu0 0.0
    %672 = vmatprep.subr.mxu0 0.0
    %673 = vmatpush1.msra.mxu0 0.0
    %674 = vmatprep.subr.mxu0 0.0
    %675 = vmatpush1.msra.mxu0 0.0
    %676 = vmatprep.subr.mxu0 0.0
    %677 = vmatpush1.msra.mxu0 0.0
    %678 = vmatprep.subr.mxu0 0.0
    %679 = vmatpush1.msra.mxu0 0.0
    %680 = vmatprep.mubr.f32.mxu0 0.0
    %681 = vmatmul.mubr.f32.gmra.mrb[0].mxu0 %v614
    %v682 = vpop.f32.mrb[0].mxu0
    %v683 = vadd.f32 0.0, %v682
    %v684 = vpop.f32.mrb[0].mxu0
    %685 = vdwg.mxu0
    %v686 = vadd.f32 %v613, %v683
    %v687 = vxor.u32 %v686, 2147483648
    %v688 = vmul.f32 %v687, 1.442695
    %v689 = vpow.pop %v688
    %v690 = vadd.f32 %v689, 1.0
    %v691 = vrcp.pop %v690
    %v692 = vmul.f32 1.0, %v691
    %v693 = vtanh.pop %v686
    %v694 = vmul.f32 %v692, %v599
    %696 = vrot.lane.b32.xlu0 %v693, 32
    %v697 = vpop.permute.xlu0 %696
    %v699 = vmul.f32 %v692, %v697
    %701 = vrot.lane.b32.xlu0 %v699, 32
    %v702 = vpop.permute.xlu0 %701
    %v704 = vadd.f32 %v694, %v702
    %v705 = vtanh.pop %v704
    %707 = vrot.lane.b32.xlu0 %v705, 32
    %v708 = vpop.permute.xlu0 %707
    %v710 = vmul.f32 %v692, %v708
    %712 = vrot.lane.b32.xlu0 %v710, 64
    %v713 = vpop.permute.xlu0 %712
    %s715 = scalar_lea.vmem [#allocation3], 32
    %716 = vst.msk [vmem:[%s715] sm:$0xff] %vm193, %v713
    %s717 = scalar_lea.vmem [#allocation2], 40
    %v718 = vld [vmem:[%s717] sm:$0xff]
    %v719 = vsel %vm193, %v713, 0
    %721 = vmatprep.subr.mxu0 0.0
    %722 = vmatpush1.msra.mxu0 %v188
    %723 = vmatprep.subr.mxu0 0.0
    %724 = vmatpush1.msra.mxu0 %v189
    %725 = vmatprep.subr.mxu0 0.0
    %726 = vmatpush1.msra.mxu0 %v190
    %727 = vmatprep.subr.mxu0 0.0
    %728 = vmatpush1.msra.mxu0 %v191
    %729 = vmatprep.subr.mxu0 0.0
    %730 = vmatpush1.msra.mxu0 0.0
    %731 = vmatprep.subr.mxu0 0.0
    %732 = vmatpush1.msra.mxu0 0.0
    %733 = vmatprep.subr.mxu0 0.0
    %734 = vmatpush1.msra.mxu0 0.0
    %735 = vmatprep.subr.mxu0 0.0
    %736 = vmatpush1.msra.mxu0 0.0
    %737 = vmatprep.subr.mxu0 0.0
    %738 = vmatpush1.msra.mxu0 0.0
    %739 = vmatprep.subr.mxu0 0.0
    %740 = vmatpush1.msra.mxu0 0.0
    %741 = vmatprep.subr.mxu0 0.0
    %742 = vmatpush1.msra.mxu0 0.0
    %743 = vmatprep.subr.mxu0 0.0
    %744 = vmatpush1.msra.mxu0 0.0
    %745 = vmatprep.subr.mxu0 0.0
    %746 = vmatpush1.msra.mxu0 0.0
    %747 = vmatprep.subr.mxu0 0.0
    %748 = vmatpush1.msra.mxu0 0.0
    %749 = vmatprep.subr.mxu0 0.0
    %750 = vmatpush1.msra.mxu0 0.0
    %751 = vmatprep.subr.mxu0 0.0
    %752 = vmatpush1.msra.mxu0 0.0
    %753 = vmatprep.subr.mxu0 0.0
    %754 = vmatpush1.msra.mxu0 0.0
    %755 = vmatprep.subr.mxu0 0.0
    %756 = vmatpush1.msra.mxu0 0.0
    %757 = vmatprep.subr.mxu0 0.0
    %758 = vmatpush1.msra.mxu0 0.0
    %759 = vmatprep.subr.mxu0 0.0
    %760 = vmatpush1.msra.mxu0 0.0
    %761 = vmatprep.subr.mxu0 0.0
    %762 = vmatpush1.msra.mxu0 0.0
    %763 = vmatprep.subr.mxu0 0.0
    %764 = vmatpush1.msra.mxu0 0.0
    %765 = vmatprep.subr.mxu0 0.0
    %766 = vmatpush1.msra.mxu0 0.0
    %767 = vmatprep.subr.mxu0 0.0
    %768 = vmatpush1.msra.mxu0 0.0
    %769 = vmatprep.subr.mxu0 0.0
    %770 = vmatpush1.msra.mxu0 0.0
    %771 = vmatprep.subr.mxu0 0.0
    %772 = vmatpush1.msra.mxu0 0.0
    %773 = vmatprep.subr.mxu0 0.0
    %774 = vmatpush1.msra.mxu0 0.0
    %775 = vmatprep.subr.mxu0 0.0
    %776 = vmatpush1.msra.mxu0 0.0
    %777 = vmatprep.subr.mxu0 0.0
    %778 = vmatpush1.msra.mxu0 0.0
    %779 = vmatprep.subr.mxu0 0.0
    %780 = vmatpush1.msra.mxu0 0.0
    %781 = vmatprep.subr.mxu0 0.0
    %782 = vmatpush1.msra.mxu0 0.0
    %783 = vmatprep.subr.mxu0 0.0
    %784 = vmatpush1.msra.mxu0 0.0
    %785 = vmatprep.mubr.f32.mxu0 0.0
    %786 = vmatmul.mubr.f32.gmra.mrb[0].mxu0 %v719
    %v787 = vpop.f32.mrb[0].mxu0
    %v788 = vadd.f32 0.0, %v787
    %v789 = vpop.f32.mrb[0].mxu0
    %790 = vdwg.mxu0
    %v791 = vadd.f32 %v718, %v788
    %v792 = vxor.u32 %v791, 2147483648
    %v793 = vmul.f32 %v792, 1.442695
    %v794 = vpow.pop %v793
    %v795 = vadd.f32 %v794, 1.0
    %v796 = vrcp.pop %v795
    %v797 = vmul.f32 1.0, %v796
    %v798 = vtanh.pop %v791
    %v799 = vmul.f32 %v797, %v704
    %801 = vrot.lane.b32.xlu0 %v798, 32
    %v802 = vpop.permute.xlu0 %801
    %v804 = vmul.f32 %v797, %v802
    %806 = vrot.lane.b32.xlu0 %v804, 32
    %v807 = vpop.permute.xlu0 %806
    %v809 = vadd.f32 %v799, %v807
    %v810 = vtanh.pop %v809
    %812 = vrot.lane.b32.xlu0 %v810, 32
    %v813 = vpop.permute.xlu0 %812
    %v815 = vmul.f32 %v797, %v813
    %817 = vrot.lane.b32.xlu0 %v815, 64
    %v818 = vpop.permute.xlu0 %817
    %s820 = scalar_lea.vmem [#allocation3], 40
    %821 = vst.msk [vmem:[%s820] sm:$0xff] %vm193, %v818
    %s822 = scalar_lea.vmem [#allocation2], 48
    %v823 = vld [vmem:[%s822] sm:$0xff]
    %v824 = vsel %vm193, %v818, 0
    %826 = vmatprep.subr.mxu0 0.0
    %827 = vmatpush1.msra.mxu0 %v188
    %828 = vmatprep.subr.mxu0 0.0
    %829 = vmatpush1.msra.mxu0 %v189
    %830 = vmatprep.subr.mxu0 0.0
    %831 = vmatpush1.msra.mxu0 %v190
    %832 = vmatprep.subr.mxu0 0.0
    %833 = vmatpush1.msra.mxu0 %v191
    %834 = vmatprep.subr.mxu0 0.0
    %835 = vmatpush1.msra.mxu0 0.0
    %836 = vmatprep.subr.mxu0 0.0
    %837 = vmatpush1.msra.mxu0 0.0
    %838 = vmatprep.subr.mxu0 0.0
    %839 = vmatpush1.msra.mxu0 0.0
    %840 = vmatprep.subr.mxu0 0.0
    %841 = vmatpush1.msra.mxu0 0.0
    %842 = vmatprep.subr.mxu0 0.0
    %843 = vmatpush1.msra.mxu0 0.0
    %844 = vmatprep.subr.mxu0 0.0
    %845 = vmatpush1.msra.mxu0 0.0
    %846 = vmatprep.subr.mxu0 0.0
    %847 = vmatpush1.msra.mxu0 0.0
    %848 = vmatprep.subr.mxu0 0.0
    %849 = vmatpush1.msra.mxu0 0.0
    %850 = vmatprep.subr.mxu0 0.0
    %851 = vmatpush1.msra.mxu0 0.0
    %852 = vmatprep.subr.mxu0 0.0
    %853 = vmatpush1.msra.mxu0 0.0
    %854 = vmatprep.subr.mxu0 0.0
    %855 = vmatpush1.msra.mxu0 0.0
    %856 = vmatprep.subr.mxu0 0.0
    %857 = vmatpush1.msra.mxu0 0.0
    %858 = vmatprep.subr.mxu0 0.0
    %859 = vmatpush1.msra.mxu0 0.0
    %860 = vmatprep.subr.mxu0 0.0
    %861 = vmatpush1.msra.mxu0 0.0
    %862 = vmatprep.subr.mxu0 0.0
    %863 = vmatpush1.msra.mxu0 0.0
    %864 = vmatprep.subr.mxu0 0.0
    %865 = vmatpush1.msra.mxu0 0.0
    %866 = vmatprep.subr.mxu0 0.0
    %867 = vmatpush1.msra.mxu0 0.0
    %868 = vmatprep.subr.mxu0 0.0
    %869 = vmatpush1.msra.mxu0 0.0
    %870 = vmatprep.subr.mxu0 0.0
    %871 = vmatpush1.msra.mxu0 0.0
    %872 = vmatprep.subr.mxu0 0.0
    %873 = vmatpush1.msra.mxu0 0.0
    %874 = vmatprep.subr.mxu0 0.0
    %875 = vmatpush1.msra.mxu0 0.0
    %876 = vmatprep.subr.mxu0 0.0
    %877 = vmatpush1.msra.mxu0 0.0
    %878 = vmatprep.subr.mxu0 0.0
    %879 = vmatpush1.msra.mxu0 0.0
    %880 = vmatprep.subr.mxu0 0.0
    %881 = vmatpush1.msra.mxu0 0.0
    %882 = vmatprep.subr.mxu0 0.0
    %883 = vmatpush1.msra.mxu0 0.0
    %884 = vmatprep.subr.mxu0 0.0
    %885 = vmatpush1.msra.mxu0 0.0
    %886 = vmatprep.subr.mxu0 0.0
    %887 = vmatpush1.msra.mxu0 0.0
    %888 = vmatprep.subr.mxu0 0.0
    %889 = vmatpush1.msra.mxu0 0.0
    %890 = vmatprep.mubr.f32.mxu0 0.0
    %891 = vmatmul.mubr.f32.gmra.mrb[0].mxu0 %v824
    %v892 = vpop.f32.mrb[0].mxu0
    %v893 = vadd.f32 0.0, %v892
    %v894 = vpop.f32.mrb[0].mxu0
    %895 = vdwg.mxu0
    %v896 = vadd.f32 %v823, %v893
    %v897 = vxor.u32 %v896, 2147483648
    %v898 = vmul.f32 %v897, 1.442695
    %v899 = vpow.pop %v898
    %v900 = vadd.f32 %v899, 1.0
    %v901 = vrcp.pop %v900
    %v902 = vmul.f32 1.0, %v901
    %v903 = vtanh.pop %v896
    %v904 = vmul.f32 %v902, %v809
    %906 = vrot.lane.b32.xlu0 %v903, 32
    %v907 = vpop.permute.xlu0 %906
    %v909 = vmul.f32 %v902, %v907
    %911 = vrot.lane.b32.xlu0 %v909, 32
    %v912 = vpop.permute.xlu0 %911
    %v914 = vadd.f32 %v904, %v912
    %v915 = vtanh.pop %v914
    %917 = vrot.lane.b32.xlu0 %v915, 32
    %v918 = vpop.permute.xlu0 %917
    %v920 = vmul.f32 %v902, %v918
    %922 = vrot.lane.b32.xlu0 %v920, 64
    %v923 = vpop.permute.xlu0 %922
    %s925 = scalar_lea.vmem [#allocation3], 48
    %926 = vst.msk [vmem:[%s925] sm:$0xff] %vm193, %v923
    %s927 = scalar_lea.vmem [#allocation2], 56
    %v928 = vld [vmem:[%s927] sm:$0xff]
    %v929 = vsel %vm193, %v923, 0
    %931 = vmatprep.subr.mxu0 0.0
    %932 = vmatpush1.msra.mxu0 %v188
    %933 = vmatprep.subr.mxu0 0.0
    %934 = vmatpush1.msra.mxu0 %v189
    %935 = vmatprep.subr.mxu0 0.0
    %936 = vmatpush1.msra.mxu0 %v190
    %937 = vmatprep.subr.mxu0 0.0
    %938 = vmatpush1.msra.mxu0 %v191
    %939 = vmatprep.subr.mxu0 0.0
    %940 = vmatpush1.msra.mxu0 0.0
    %941 = vmatprep.subr.mxu0 0.0
    %942 = vmatpush1.msra.mxu0 0.0
    %943 = vmatprep.subr.mxu0 0.0
    %944 = vmatpush1.msra.mxu0 0.0
    %945 = vmatprep.subr.mxu0 0.0
    %946 = vmatpush1.msra.mxu0 0.0
    %947 = vmatprep.subr.mxu0 0.0
    %948 = vmatpush1.msra.mxu0 0.0
    %949 = vmatprep.subr.mxu0 0.0
    %950 = vmatpush1.msra.mxu0 0.0
    %951 = vmatprep.subr.mxu0 0.0
    %952 = vmatpush1.msra.mxu0 0.0
    %953 = vmatprep.subr.mxu0 0.0
    %954 = vmatpush1.msra.mxu0 0.0
    %955 = vmatprep.subr.mxu0 0.0
    %956 = vmatpush1.msra.mxu0 0.0
    %957 = vmatprep.subr.mxu0 0.0
    %958 = vmatpush1.msra.mxu0 0.0
    %959 = vmatprep.subr.mxu0 0.0
    %960 = vmatpush1.msra.mxu0 0.0
    %961 = vmatprep.subr.mxu0 0.0
    %962 = vmatpush1.msra.mxu0 0.0
    %963 = vmatprep.subr.mxu0 0.0
    %964 = vmatpush1.msra.mxu0 0.0
    %965 = vmatprep.subr.mxu0 0.0
    %966 = vmatpush1.msra.mxu0 0.0
    %967 = vmatprep.subr.mxu0 0.0
    %968 = vmatpush1.msra.mxu0 0.0
    %969 = vmatprep.subr.mxu0 0.0
    %970 = vmatpush1.msra.mxu0 0.0
    %971 = vmatprep.subr.mxu0 0.0
    %972 = vmatpush1.msra.mxu0 0.0
    %973 = vmatprep.subr.mxu0 0.0
    %974 = vmatpush1.msra.mxu0 0.0
    %975 = vmatprep.subr.mxu0 0.0
    %976 = vmatpush1.msra.mxu0 0.0
    %977 = vmatprep.subr.mxu0 0.0
    %978 = vmatpush1.msra.mxu0 0.0
    %979 = vmatprep.subr.mxu0 0.0
    %980 = vmatpush1.msra.mxu0 0.0
    %981 = vmatprep.subr.mxu0 0.0
    %982 = vmatpush1.msra.mxu0 0.0
    %983 = vmatprep.subr.mxu0 0.0
    %984 = vmatpush1.msra.mxu0 0.0
    %985 = vmatprep.subr.mxu0 0.0
    %986 = vmatpush1.msra.mxu0 0.0
    %987 = vmatprep.subr.mxu0 0.0
    %988 = vmatpush1.msra.mxu0 0.0
    %989 = vmatprep.subr.mxu0 0.0
    %990 = vmatpush1.msra.mxu0 0.0
    %991 = vmatprep.subr.mxu0 0.0
    %992 = vmatpush1.msra.mxu0 0.0
    %993 = vmatprep.subr.mxu0 0.0
    %994 = vmatpush1.msra.mxu0 0.0
    %995 = vmatprep.mubr.f32.mxu0 0.0
    %996 = vmatmul.mubr.f32.gmra.mrb[0].mxu0 %v929
    %v997 = vpop.f32.mrb[0].mxu0
    %v998 = vadd.f32 0.0, %v997
    %v999 = vpop.f32.mrb[0].mxu0
    %1000 = vdwg.mxu0
    %v1001 = vadd.f32 %v928, %v998
    %v1002 = vxor.u32 %v1001, 2147483648
    %v1003 = vmul.f32 %v1002, 1.442695
    %v1004 = vpow.pop %v1003
    %v1005 = vadd.f32 %v1004, 1.0
    %v1006 = vrcp.pop %v1005
    %v1007 = vmul.f32 1.0, %v1006
    %v1008 = vtanh.pop %v1001
    %v1009 = vmul.f32 %v1007, %v914
    %1011 = vrot.lane.b32.xlu0 %v1008, 32
    %v1012 = vpop.permute.xlu0 %1011
    %v1014 = vmul.f32 %v1007, %v1012
    %1016 = vrot.lane.b32.xlu0 %v1014, 32
    %v1017 = vpop.permute.xlu0 %1016
    %v1019 = vadd.f32 %v1009, %v1017
    %v1020 = vtanh.pop %v1019
    %1022 = vrot.lane.b32.xlu0 %v1020, 32
    %v1023 = vpop.permute.xlu0 %1022
    %v1025 = vmul.f32 %v1007, %v1023
    %1027 = vrot.lane.b32.xlu0 %v1025, 64
    %v1028 = vpop.permute.xlu0 %1027
    %s1030 = scalar_lea.vmem [#allocation3], 56
    %1031 = vst.msk [vmem:[%s1030] sm:$0xff] %vm193, %v1028
    %s1032 = scalar_lea.vmem [#allocation2], 64
    %v1033 = vld [vmem:[%s1032] sm:$0xff]
    %v1034 = vsel %vm193, %v1028, 0
    %1036 = vmatprep.subr.mxu0 0.0
    %1037 = vmatpush1.msra.mxu0 %v188
    %1038 = vmatprep.subr.mxu0 0.0
    %1039 = vmatpush1.msra.mxu0 %v189
    %1040 = vmatprep.subr.mxu0 0.0
    %1041 = vmatpush1.msra.mxu0 %v190
    %1042 = vmatprep.subr.mxu0 0.0
    %1043 = vmatpush1.msra.mxu0 %v191
    %1044 = vmatprep.subr.mxu0 0.0
    %1045 = vmatpush1.msra.mxu0 0.0
    %1046 = vmatprep.subr.mxu0 0.0
    %1047 = vmatpush1.msra.mxu0 0.0
    %1048 = vmatprep.subr.mxu0 0.0
    %1049 = vmatpush1.msra.mxu0 0.0
    %1050 = vmatprep.subr.mxu0 0.0
    %1051 = vmatpush1.msra.mxu0 0.0
    %1052 = vmatprep.subr.mxu0 0.0
    %1053 = vmatpush1.msra.mxu0 0.0
    %1054 = vmatprep.subr.mxu0 0.0
    %1055 = vmatpush1.msra.mxu0 0.0
    %1056 = vmatprep.subr.mxu0 0.0
    %1057 = vmatpush1.msra.mxu0 0.0
    %1058 = vmatprep.subr.mxu0 0.0
    %1059 = vmatpush1.msra.mxu0 0.0
    %1060 = vmatprep.subr.mxu0 0.0
    %1061 = vmatpush1.msra.mxu0 0.0
    %1062 = vmatprep.subr.mxu0 0.0
    %1063 = vmatpush1.msra.mxu0 0.0
    %1064 = vmatprep.subr.mxu0 0.0
    %1065 = vmatpush1.msra.mxu0 0.0
    %1066 = vmatprep.subr.mxu0 0.0
    %1067 = vmatpush1.msra.mxu0 0.0
    %1068 = vmatprep.subr.mxu0 0.0
    %1069 = vmatpush1.msra.mxu0 0.0
    %1070 = vmatprep.subr.mxu0 0.0
    %1071 = vmatpush1.msra.mxu0 0.0
    %1072 = vmatprep.subr.mxu0 0.0
    %1073 = vmatpush1.msra.mxu0 0.0
    %1074 = vmatprep.subr.mxu0 0.0
    %1075 = vmatpush1.msra.mxu0 0.0
    %1076 = vmatprep.subr.mxu0 0.0
    %1077 = vmatpush1.msra.mxu0 0.0
    %1078 = vmatprep.subr.mxu0 0.0
    %1079 = vmatpush1.msra.mxu0 0.0
    %1080 = vmatprep.subr.mxu0 0.0
    %1081 = vmatpush1.msra.mxu0 0.0
    %1082 = vmatprep.subr.mxu0 0.0
    %1083 = vmatpush1.msra.mxu0 0.0
    %1084 = vmatprep.subr.mxu0 0.0
    %1085 = vmatpush1.msra.mxu0 0.0
    %1086 = vmatprep.subr.mxu0 0.0
    %1087 = vmatpush1.msra.mxu0 0.0
    %1088 = vmatprep.subr.mxu0 0.0
    %1089 = vmatpush1.msra.mxu0 0.0
    %1090 = vmatprep.subr.mxu0 0.0
    %1091 = vmatpush1.msra.mxu0 0.0
    %1092 = vmatprep.subr.mxu0 0.0
    %1093 = vmatpush1.msra.mxu0 0.0
    %1094 = vmatprep.subr.mxu0 0.0
    %1095 = vmatpush1.msra.mxu0 0.0
    %1096 = vmatprep.subr.mxu0 0.0
    %1097 = vmatpush1.msra.mxu0 0.0
    %1098 = vmatprep.subr.mxu0 0.0
    %1099 = vmatpush1.msra.mxu0 0.0
    %1100 = vmatprep.mubr.f32.mxu0 0.0
    %1101 = vmatmul.mubr.f32.gmra.mrb[0].mxu0 %v1034
    %v1102 = vpop.f32.mrb[0].mxu0
    %v1103 = vadd.f32 0.0, %v1102
    %v1104 = vpop.f32.mrb[0].mxu0
    %1105 = vdwg.mxu0
    %v1106 = vadd.f32 %v1033, %v1103
    %v1107 = vxor.u32 %v1106, 2147483648
    %v1108 = vmul.f32 %v1107, 1.442695
    %v1109 = vpow.pop %v1108
    %v1110 = vadd.f32 %v1109, 1.0
    %v1111 = vrcp.pop %v1110
    %v1112 = vmul.f32 1.0, %v1111
    %v1113 = vtanh.pop %v1106
    %v1114 = vmul.f32 %v1112, %v1019
    %1116 = vrot.lane.b32.xlu0 %v1113, 32
    %v1117 = vpop.permute.xlu0 %1116
    %v1119 = vmul.f32 %v1112, %v1117
    %1121 = vrot.lane.b32.xlu0 %v1119, 32
    %v1122 = vpop.permute.xlu0 %1121
    %v1124 = vadd.f32 %v1114, %v1122
    %v1125 = vtanh.pop %v1124
    %1127 = vrot.lane.b32.xlu0 %v1125, 32
    %v1128 = vpop.permute.xlu0 %1127
    %v1130 = vmul.f32 %v1112, %v1128
    %1132 = vrot.lane.b32.xlu0 %v1130, 64
    %v1133 = vpop.permute.xlu0 %1132
    %s1135 = scalar_lea.vmem [#allocation3], 64
    %1136 = vst.msk [vmem:[%s1135] sm:$0xff] %vm193, %v1133
    %v1137 = vld [vmem:[#allocation3] sm:$0xff]
    %v1138 = vld [vmem:[#allocation3 + $0x8] sm:$0xff]
    %v1139 = vld [vmem:[#allocation3 + $0x10] sm:$0xff]
    %v1140 = vld [vmem:[#allocation3 + $0x18] sm:$0xff]
    %v1141 = vld [vmem:[#allocation3 + $0x20] sm:$0xff]
    %v1142 = vld [vmem:[#allocation3 + $0x28] sm:$0xff]
    %v1143 = vld [vmem:[#allocation3 + $0x30] sm:$0xff]
    %v1144 = vld [vmem:[#allocation3 + $0x38] sm:$0xff]
    %v1145 = vld [vmem:[#allocation3 + $0x40] sm:$0xff]
    %v1146 = vld [vmem:[%s4] sm:$0xff]
    %v1147 = vld [vmem:[%s4 + $0x8] sm:$0xff]
    %v1148 = vld [vmem:[%s4 + $0x10] sm:$0xff]
    %v1149 = vld [vmem:[%s4 + $0x18] sm:$0xff]
    %v1150 = vld [vmem:[%s5] sm:$0x1]
    %v1152 = vlaneseq
    %v1153 = vshrl.u32 %v1152, 7
    %v1154 = vsub.s32 0, %v1153
    %v1155 = vrot.slane %v1150, %v1154
    %v1158 = vsel %vm193, %v1137, 0
    %v1161 = vsel %vm193, %v1138, 0
    %v1164 = vsel %vm193, %v1139, 0
    %v1167 = vsel %vm193, %v1140, 0
    %v1170 = vsel %vm193, %v1141, 0
    %v1173 = vsel %vm193, %v1142, 0
    %v1176 = vsel %vm193, %v1143, 0
    %v1179 = vsel %vm193, %v1144, 0
    %v1182 = vsel %vm193, %v1145, 0
    %1184 = vmatprep.subr.mxu0 0.0
    %1185 = vmatpush1.msra.mxu0 %v1146
    %1186 = vmatprep.subr.mxu0 0.0
    %1187 = vmatpush1.msra.mxu0 %v1147
    %1188 = vmatprep.subr.mxu0 0.0
    %1189 = vmatpush1.msra.mxu0 %v1148
    %1190 = vmatprep.subr.mxu0 0.0
    %1191 = vmatpush1.msra.mxu0 %v1149
    %1192 = vmatprep.subr.mxu0 0.0
    %1193 = vmatpush1.msra.mxu0 0.0
    %1194 = vmatprep.subr.mxu0 0.0
    %1195 = vmatpush1.msra.mxu0 0.0
    %1196 = vmatprep.subr.mxu0 0.0
    %1197 = vmatpush1.msra.mxu0 0.0
    %1198 = vmatprep.subr.mxu0 0.0
    %1199 = vmatpush1.msra.mxu0 0.0
    %1200 = vmatprep.subr.mxu0 0.0
    %1201 = vmatpush1.msra.mxu0 0.0
    %1202 = vmatprep.subr.mxu0 0.0
    %1203 = vmatpush1.msra.mxu0 0.0
    %1204 = vmatprep.subr.mxu0 0.0
    %1205 = vmatpush1.msra.mxu0 0.0
    %1206 = vmatprep.subr.mxu0 0.0
    %1207 = vmatpush1.msra.mxu0 0.0
    %1208 = vmatprep.subr.mxu0 0.0
    %1209 = vmatpush1.msra.mxu0 0.0
    %1210 = vmatprep.subr.mxu0 0.0
    %1211 = vmatpush1.msra.mxu0 0.0
    %1212 = vmatprep.subr.mxu0 0.0
    %1213 = vmatpush1.msra.mxu0 0.0
    %1214 = vmatprep.subr.mxu0 0.0
    %1215 = vmatpush1.msra.mxu0 0.0
    %1216 = vmatprep.subr.mxu0 0.0
    %1217 = vmatpush1.msra.mxu0 0.0
    %1218 = vmatprep.subr.mxu0 0.0
    %1219 = vmatpush1.msra.mxu0 0.0
    %1220 = vmatprep.subr.mxu0 0.0
    %1221 = vmatpush1.msra.mxu0 0.0
    %1222 = vmatprep.subr.mxu0 0.0
    %1223 = vmatpush1.msra.mxu0 0.0
    %1224 = vmatprep.subr.mxu0 0.0
    %1225 = vmatpush1.msra.mxu0 0.0
    %1226 = vmatprep.subr.mxu0 0.0
    %1227 = vmatpush1.msra.mxu0 0.0
    %1228 = vmatprep.subr.mxu0 0.0
    %1229 = vmatpush1.msra.mxu0 0.0
    %1230 = vmatprep.subr.mxu0 0.0
    %1231 = vmatpush1.msra.mxu0 0.0
    %1232 = vmatprep.subr.mxu0 0.0
    %1233 = vmatpush1.msra.mxu0 0.0
    %1234 = vmatprep.subr.mxu0 0.0
    %1235 = vmatpush1.msra.mxu0 0.0
    %1236 = vmatprep.subr.mxu0 0.0
    %1237 = vmatpush1.msra.mxu0 0.0
    %1238 = vmatprep.subr.mxu0 0.0
    %1239 = vmatpush1.msra.mxu0 0.0
    %1240 = vmatprep.subr.mxu0 0.0
    %1241 = vmatpush1.msra.mxu0 0.0
    %1242 = vmatprep.subr.mxu0 0.0
    %1243 = vmatpush1.msra.mxu0 0.0
    %1244 = vmatprep.subr.mxu0 0.0
    %1245 = vmatpush1.msra.mxu0 0.0
    %1246 = vmatprep.subr.mxu0 0.0
    %1247 = vmatpush1.msra.mxu0 0.0
    %1248 = vmatprep.mubr.f32.mxu0 0.0
    %1249 = vmatmul.mubr.f32.gmra.mrb[0].mxu0 %v1158
    %v1250 = vpop.f32.mrb[0].mxu0
    %v1251 = vadd.f32 %v1155, %v1250
    %v1252 = vpop.f32.mrb[0].mxu0
    %1253 = vmatprep.mubr.f32.mxu0 0.0
    %1254 = vmatmul.mubr.f32.gmra.mrb[0].mxu0 %v1161
    %v1255 = vpop.f32.mrb[0].mxu0
    %v1256 = vadd.f32 %v1155, %v1255
    %v1257 = vpop.f32.mrb[0].mxu0
    %1258 = vmatprep.mubr.f32.mxu0 0.0
    %1259 = vmatmul.mubr.f32.gmra.mrb[0].mxu0 %v1164
    %v1260 = vpop.f32.mrb[0].mxu0
    %v1261 = vadd.f32 %v1155, %v1260
    %v1262 = vpop.f32.mrb[0].mxu0
    %1263 = vmatprep.mubr.f32.mxu0 0.0
    %1264 = vmatmul.mubr.f32.gmra.mrb[0].mxu0 %v1167
    %v1265 = vpop.f32.mrb[0].mxu0
    %v1266 = vadd.f32 %v1155, %v1265
    %v1267 = vpop.f32.mrb[0].mxu0
    %1268 = vmatprep.mubr.f32.mxu0 0.0
    %1269 = vmatmul.mubr.f32.gmra.mrb[0].mxu0 %v1170
    %v1270 = vpop.f32.mrb[0].mxu0
    %v1271 = vadd.f32 %v1155, %v1270
    %v1272 = vpop.f32.mrb[0].mxu0
    %1273 = vmatprep.mubr.f32.mxu0 0.0
    %1274 = vmatmul.mubr.f32.gmra.mrb[0].mxu0 %v1173
    %v1275 = vpop.f32.mrb[0].mxu0
    %v1276 = vadd.f32 %v1155, %v1275
    %v1277 = vpop.f32.mrb[0].mxu0
    %1278 = vmatprep.mubr.f32.mxu0 0.0
    %1279 = vmatmul.mubr.f32.gmra.mrb[0].mxu0 %v1176
    %v1280 = vpop.f32.mrb[0].mxu0
    %v1281 = vadd.f32 %v1155, %v1280
    %v1282 = vpop.f32.mrb[0].mxu0
    %1283 = vmatprep.mubr.f32.mxu0 0.0
    %1284 = vmatmul.mubr.f32.gmra.mrb[0].mxu0 %v1179
    %v1285 = vpop.f32.mrb[0].mxu0
    %v1286 = vadd.f32 %v1155, %v1285
    %v1287 = vpop.f32.mrb[0].mxu0
    %1288 = vmatprep.mubr.f32.mxu0 0.0
    %1289 = vmatmul.mubr.f32.gmra.mrb[0].mxu0 %v1182
    %v1290 = vpop.f32.mrb[0].mxu0
    %v1291 = vadd.f32 %v1155, %v1290
    %v1292 = vpop.f32.mrb[0].mxu0
    %1293 = vdwg.mxu0
    %1294 = vst [vmem:[#allocation4] sm:$0xff] %v1251
    %1295 = vst [vmem:[#allocation4 + $0x8] sm:$0xff] %v1256
    %1296 = vst [vmem:[#allocation4 + $0x10] sm:$0xff] %v1261
    %1297 = vst [vmem:[#allocation4 + $0x18] sm:$0xff] %v1266
    %1298 = vst [vmem:[#allocation4 + $0x20] sm:$0xff] %v1271
    %1299 = vst [vmem:[#allocation4 + $0x28] sm:$0xff] %v1276
    %1300 = vst [vmem:[#allocation4 + $0x30] sm:$0xff] %v1281
    %1301 = vst [vmem:[#allocation4 + $0x38] sm:$0xff] %v1286
    %1302 = vst [vmem:[#allocation4 + $0x40] sm:$0xff] %v1291
    // Predicated region
    $region26: #{tpu_custom_call.1} parent=1 // pred_check
      _
    $region27: #{tpu_custom_call.1} parent=1 // pred_check_branch
      %1304 = sbr.rel (0) target = $region29
    $region28: #{tpu_custom_call.1} parent=1 // pred_region
      %s1306 = ssub.s32 1152, 1152
      %1307 = vsyncadd [#allocation5], %s1306
      %s1308 = sshll.u32 [#allocation4], 4
      %s1309 = int_to_ptr.vmem [resolvable:$true] %s1308
      %1314 = dma.vmem_to_hbm [thread:$0]  %s1309, 1152, %s6, [#allocation5], 128, 128, 8
    $region29: #{tpu_custom_call.1} parent=1 // pred_fallthru
      _
    // Predicated region
    $region30: #{tpu_custom_call.1} parent=1 // pred_check
      _
    $region31: #{tpu_custom_call.1} parent=1 // pred_check_branch
      %1316 = sbr.rel (0) target = $region33
    $region32: #{tpu_custom_call.1} parent=1 // pred_region
      %1317 = dma.done [#allocation5], 1152
    $region33: #{tpu_custom_call.1} parent=1 // pred_fallthru
      _
    %1318 = vsyncpa [#allocation5], 1

</llo_original>
